<compile_context>
chip_gen: v6e
topology: v6e:2x2x1
jax: 0.10.0
libtpu: 0.0.40
codegen_flags: <defaults>
</compile_context>

<pallas_src>
import functools

import jax
import jax.numpy as jnp
from jax.experimental import pallas as pl
from jax.experimental.pallas import tpu as pltpu

LN_EPS = 1e-5


def _layernorm(t, gamma, beta):
    mu = jnp.mean(t, axis=-1, keepdims=True)
    var = jnp.mean((t - mu) ** 2, axis=-1, keepdims=True)
    return (t - mu) * jax.lax.rsqrt(var + LN_EPS) * gamma + beta


def _cross_attn_kernel(x_ref, c_ref, gx_ref, bx_ref, gc_ref, bc_ref,
                       wq_ref, wk_ref, wv_ref, wo_ref, bo_ref, o_ref,
                       *, bblk, n, m, heads, dim_head, mxu_dtype):
    rows_x, dim = x_ref.shape            # rows_x = bblk * n
    rows_c, cdim = c_ref.shape           # rows_c = bblk * m
    inner = heads * dim_head

    # LayerNorms in f32 on the flat (rows, feature) slabs.
    x = x_ref[...].astype(jnp.float32)
    c = c_ref[...].astype(jnp.float32)
    xn = _layernorm(x, gx_ref[...].astype(jnp.float32), bx_ref[...].astype(jnp.float32))
    cn = _layernorm(c, gc_ref[...].astype(jnp.float32), bc_ref[...].astype(jnp.float32))

    # Q / K / V projections: wide 2-D MXU matmuls, low-precision operands, f32 acc.
    # (wq is pre-scaled by dim_head**-0.5 and all weights pre-cast in the wrapper.)
    xb = xn.astype(mxu_dtype)
    cb = cn.astype(mxu_dtype)
    q = jnp.dot(xb, wq_ref[...], preferred_element_type=jnp.float32)   # (rows_x, inner)
    k = jnp.dot(cb, wk_ref[...], preferred_element_type=jnp.float32)   # (rows_c, inner)
    v = jnp.dot(cb, wv_ref[...], preferred_element_type=jnp.float32)   # (rows_c, inner)

    # Batch back to a leading (einsum-batch) axis: free split of the sublane axis
    # (n, m are multiples of 8 for f32 in practice).
    q3 = q.reshape(bblk, n, inner)
    k3 = k.reshape(bblk, m, inner)
    v3 = v.reshape(bblk, m, inner)

    # Per-head attention (static unroll over a small, fixed head count).  Each head's
    # output is folded directly into the output-projection accumulator: no VMEM slab,
    # no masked lane-sliced stores, no concatenate, no store+reload before W_out.
    acc = jnp.zeros((rows_x, dim), jnp.float32)
    for h in range(heads):
        lo = h * dim_head
        qh = q3[:, :, lo:lo + dim_head].astype(mxu_dtype)   # (bblk, n, d)
        kh = k3[:, :, lo:lo + dim_head].astype(mxu_dtype)   # (bblk, m, d)
        vh = v3[:, :, lo:lo + dim_head].astype(mxu_dtype)   # (bblk, m, d)
        # Contraction on the shared 'd' axis of both operands -> no explicit .T.
        sim = jnp.einsum('bid,bjd->bij', qh, kh,
                         preferred_element_type=jnp.float32)            # (bblk, n, m)
        sim = sim - jnp.max(sim, axis=-1, keepdims=True)
        p = jnp.exp(sim)                                                # f32 softmax
        attn = p * pl.reciprocal(jnp.sum(p, axis=-1, keepdims=True), approx=True)
        oh = jnp.einsum('bij,bjd->bid', attn.astype(mxu_dtype), vh,
                        preferred_element_type=jnp.float32)             # (bblk, n, d)
        acc = acc + jnp.dot(oh.reshape(rows_x, dim_head).astype(mxu_dtype),
                            wo_ref[lo:lo + dim_head, :],                # static ref slice
                            preferred_element_type=jnp.float32)

    o_ref[...] = (acc + bo_ref[...].astype(jnp.float32)).astype(o_ref.dtype)
    # TODO(synk): mask / context_mask path not implemented (forward is called with
    # mask=None); dropout has p=0.0 so it is the identity.
    # TODO(synk): for long context lengths M, add a KV grid axis (last, "arbitrary")
    # with online-softmax m/l/acc carries so sim / k / v stay bounded in VMEM
    # (matters most on v7x's 64 MiB VMEM).


def _tpu_generation():
    """Best-effort generation-aware sizing: MXU row target/cap and physical VMEM."""
    row_target, row_cap = 256, 512          # v6e / v7x: 2x256^2 MXU
    vmem_physical = 64 << 20                # conservative default (v7x per-TC VMEM)
    try:
        kind = jax.devices()[0].device_kind.lower()
    except Exception:
        kind = ""
    if "v5" in kind and ("lite" in kind or "5e" in kind):
        row_target, row_cap = 128, 256      # v5e: 4x128^2 MXU
    try:
        vmem_physical = int(pltpu.get_tpu_info().vmem_capacity_bytes)
    except Exception:
        pass
    return row_target, row_cap, vmem_physical


def _pick_batch_block(b, n, row_target, row_cap):
    """Fold enough batch elements per grid step to give the MXU ~row_target rows,
    while always keeping >= 2 grid steps so both v7x TensorCores get work."""
    min_steps = 2 if b >= 2 else 1
    divs = [d for d in range(1, b + 1)
            if b % d == 0 and b // d >= min_steps and d * n <= row_cap]
    if not divs:
        return 1
    full = [d for d in divs if d * n >= row_target]
    return min(full) if full else max(divs)


def _estimate_vmem_bytes(bblk, n, m, dim, cdim, inner, w_itemsize):
    """Rough per-step VMEM footprint: pipelined I/O blocks + params + f32 temps."""
    f32 = 4
    rows_x, rows_c = bblk * n, bblk * m
    io_blocks = 2 * (rows_x * dim + rows_c * cdim + rows_x * dim) * f32   # dbl-buffered
    weights = (dim * inner + 2 * cdim * inner + inner * dim) * w_itemsize \
        + (3 * dim + 2 * cdim) * f32                                      # single-buffered
    interm = (rows_x * dim + rows_c * cdim                                # xn, cn
              + rows_x * inner + 2 * rows_c * inner                       # q, k, v
              + 3 * bblk * n * m                                          # sim / p / attn
              + 2 * rows_x * dim) * f32                                   # acc / out
    return io_blocks + weights + interm


def cross_attention(x, context, params, *, heads, dim_head, mxu_dtype=jnp.bfloat16):
    b, n, dim = x.shape
    _, m, cdim = context.shape
    inner = heads * dim_head
    scale = dim_head ** (-0.5)

    # Wrapper-side (free) weight prep: split the fused KV projection, fold the q scale
    # into wq, and cast MXU-operand weights once — halves weight DMA/VMEM bytes and
    # removes per-step VPU casts.  LN params / output bias stay f32.
    wkv = params["wkv"]
    wq = (params["wq"] * scale).astype(mxu_dtype)
    wk = wkv[:, :inner].astype(mxu_dtype)
    wv = wkv[:, inner:].astype(mxu_dtype)
    wo = params["wo"].astype(mxu_dtype)
    gx = params["gx"].astype(jnp.float32).reshape(1, dim)
    bx = params["bx"].astype(jnp.float32).reshape(1, dim)
    gc = params["gc"].astype(jnp.float32).reshape(1, cdim)
    bc = params["bc"].astype(jnp.float32).reshape(1, cdim)
    bo = params["bo"].astype(jnp.float32).reshape(1, dim)

    row_target, row_cap, vmem_physical = _tpu_generation()
    bblk = _pick_batch_block(b, n, row_target, row_cap)
    grid = (b // bblk,)

    vmem_limit = _estimate_vmem_bytes(bblk, n, m, dim, cdim, inner,
                                      jnp.dtype(mxu_dtype).itemsize)
    vmem_limit = max(2 * vmem_limit + (8 << 20), 32 << 20)     # 2x estimate + headroom
    vmem_limit = int(min(vmem_limit, int(vmem_physical * 0.9)))

    # Pass x / context / output as 2-D (batch*seq, feature) slabs: no in-kernel
    # 3-D -> 2-D reshape, and blocks are lane-dense whenever the feature dim >= 128.
    x2 = x.reshape(b * n, dim)
    c2 = context.reshape(b * m, cdim)

    kernel = functools.partial(_cross_attn_kernel, bblk=bblk, n=n, m=m, heads=heads,
                               dim_head=dim_head, mxu_dtype=mxu_dtype)

    def build(single_buffer_params):
        # Grid-invariant params: constant index_map; single-buffer them when possible
        # (no prefetch benefit; double-buffering just doubles their VMEM footprint).
        if single_buffer_params:
            rep = lambda shape: pl.BlockSpec(shape, lambda i: (0, 0),
                                             pipeline_mode=pl.Buffered(1))
        else:
            rep = lambda shape: pl.BlockSpec(shape, lambda i: (0, 0))
        return pl.pallas_call(
            kernel,
            out_shape=jax.ShapeDtypeStruct((b * n, dim), x.dtype),
            grid_spec=pltpu.PrefetchScalarGridSpec(
                num_scalar_prefetch=0,
                grid=grid,
                in_specs=[
                    pl.BlockSpec((bblk * n, dim), lambda i: (i, 0)),    # x rows
                    pl.BlockSpec((bblk * m, cdim), lambda i: (i, 0)),   # context rows
                    rep((1, dim)),            # LN gamma (x)
                    rep((1, dim)),            # LN beta  (x)
                    rep((1, cdim)),           # LN gamma (context)
                    rep((1, cdim)),           # LN beta  (context)
                    rep((dim, inner)),        # W_q (pre-scaled)
                    rep((cdim, inner)),       # W_k
                    rep((cdim, inner)),       # W_v
                    rep((inner, dim)),        # W_out
                    rep((1, dim)),            # b_out
                ],
                out_specs=pl.BlockSpec((bblk * n, dim), lambda i: (i, 0)),
            ),
            compiler_params=pltpu.CompilerParams(
                dimension_semantics=("parallel",),
                vmem_limit_bytes=vmem_limit,
            ),
        )
    # TODO(synk): on v7x, consider pltpu.CORE_PARALLEL (or pl.core_map over a 2-core
    # mesh) on the batch grid axis for explicit per-TensorCore sharding.

    args = (x2, c2, gx, bx, gc, bc, wq, wk, wv, wo, bo)
    try:
        out2 = build(True)(*args)
    except Exception:
        # pl.Buffered(1) is a perf-only hint; fall back to default double buffering
        # if this JAX / Mosaic version rejects single-buffered input specs.
        out2 = build(False)(*args)
    return out2.reshape(b, n, dim)


def reference(x, context, params, *, heads, dim_head):
    # Pure-JAX f32 reference mirroring the PyTorch forward.
    inner = heads * dim_head
    scale = dim_head ** (-0.5)
    xn = _layernorm(x, params["gx"], params["bx"])
    cn = _layernorm(context, params["gc"], params["bc"])
    q = xn @ params["wq"] * scale
    kv = cn @ params["wkv"]
    k, v = kv[..., :inner], kv[..., inner:]

    def split_heads(t):
        b_, s_, _ = t.shape
        return t.reshape(b_, s_, heads, dim_head).transpose(0, 2, 1, 3)

    q, k, v = map(split_heads, (q, k, v))
    sim = jnp.einsum("bhid,bhjd->bhij", q, k)
    attn = jax.nn.softmax(sim, axis=-1)
    out = jnp.einsum("bhij,bhjd->bhid", attn, v)
    out = out.transpose(0, 2, 1, 3).reshape(x.shape[0], x.shape[1], inner)
    return out @ params["wo"] + params["bo"]


if __name__ == "__main__":
    # Small shapes consistent with the module.
    B, N, M = 2, 8, 8
    DIM, CDIM = 32, 32
    HEADS, DIM_HEAD = 2, 16
    INNER = HEADS * DIM_HEAD

    key = jax.random.PRNGKey(0)
    ks = jax.random.split(key, 6)
    x = jax.random.normal(ks[0], (B, N, DIM), jnp.float32)
    context = jax.random.normal(ks[1], (B, M, CDIM), jnp.float32)

    params = {
        "gx": jnp.ones((1, DIM), jnp.float32),
        "bx": jnp.zeros((1, DIM), jnp.float32),
        "gc": jnp.ones((1, CDIM), jnp.float32),
        "bc": jnp.zeros((1, CDIM), jnp.float32),
        "wq": 0.05 * jax.random.normal(ks[2], (DIM, INNER), jnp.float32),
        "wkv": 0.05 * jax.random.normal(ks[3], (CDIM, 2 * INNER), jnp.float32),
        "wo": 0.05 * jax.random.normal(ks[4], (INNER, DIM), jnp.float32),
        "bo": 0.01 * jax.random.normal(ks[5], (1, DIM), jnp.float32),
    }

    out = cross_attention(x, context, params, heads=HEADS, dim_head=DIM_HEAD)
    out = jax.block_until_ready(out)

    ref = reference(x, context, params, heads=HEADS, dim_head=DIM_HEAD)
    assert out.shape == (B, N, DIM)
    # bf16 MXU operands + approx reciprocal -> compare at bf16-level tolerance.
    assert jnp.allclose(out, ref, atol=3e-2, rtol=3e-2), "mismatch vs reference"
    print("KERNEL_OK")
</pallas_src>

<mosaic_0001>
module attributes {stable_mosaic.version = 11 : i64} {
  func.func @_cross_attn_kernel(%arg0: i32, %arg1: memref<8x32xf32, #tpu.memory_space<vmem>>, %arg2: memref<8x32xf32, #tpu.memory_space<vmem>>, %arg3: memref<1x32xf32, #tpu.memory_space<vmem>>, %arg4: memref<1x32xf32, #tpu.memory_space<vmem>>, %arg5: memref<1x32xf32, #tpu.memory_space<vmem>>, %arg6: memref<1x32xf32, #tpu.memory_space<vmem>>, %arg7: memref<32x32xbf16, #tpu.memory_space<vmem>>, %arg8: memref<32x32xbf16, #tpu.memory_space<vmem>>, %arg9: memref<32x32xbf16, #tpu.memory_space<vmem>>, %arg10: memref<32x32xbf16, #tpu.memory_space<vmem>>, %arg11: memref<1x32xf32, #tpu.memory_space<vmem>>, %arg12: memref<8x32xf32, #tpu.memory_space<vmem>>) attributes {dimension_semantics = [#tpu.dimension_semantics<parallel>], iteration_bounds = array<i64: 2>, scalar_prefetch = 0 : i64, scratch_operands = 0 : i64, tpu.core_type = #tpu.core_type<tc>, window_params = [{transform_indices = @transform_0, window_bounds = array<i64: 8, 32>}, {transform_indices = @transform_1, window_bounds = array<i64: 8, 32>}, {pipeline_mode = #tpu.pipeline_mode<synchronous>, transform_indices = @transform_2, window_bounds = array<i64: 1, 32>}, {pipeline_mode = #tpu.pipeline_mode<synchronous>, transform_indices = @transform_3, window_bounds = array<i64: 1, 32>}, {pipeline_mode = #tpu.pipeline_mode<synchronous>, transform_indices = @transform_4, window_bounds = array<i64: 1, 32>}, {pipeline_mode = #tpu.pipeline_mode<synchronous>, transform_indices = @transform_5, window_bounds = array<i64: 1, 32>}, {pipeline_mode = #tpu.pipeline_mode<synchronous>, transform_indices = @transform_6, window_bounds = array<i64: 32, 32>}, {pipeline_mode = #tpu.pipeline_mode<synchronous>, transform_indices = @transform_7, window_bounds = array<i64: 32, 32>}, {pipeline_mode = #tpu.pipeline_mode<synchronous>, transform_indices = @transform_8, window_bounds = array<i64: 32, 32>}, {pipeline_mode = #tpu.pipeline_mode<synchronous>, transform_indices = @transform_9, window_bounds = array<i64: 32, 32>}, {pipeline_mode = #tpu.pipeline_mode<synchronous>, transform_indices = @transform_10, window_bounds = array<i64: 1, 32>}, {transform_indices = @transform_11, window_bounds = array<i64: 8, 32>}]} {
    %c0 = arith.constant 0 : index
    %c0_0 = arith.constant 0 : index
    %0 = vector.load %arg1[%c0, %c0_0] : memref<8x32xf32, #tpu.memory_space<vmem>>, vector<8x32xf32>
    %c0_1 = arith.constant 0 : index
    %c0_2 = arith.constant 0 : index
    %1 = vector.load %arg2[%c0_1, %c0_2] : memref<8x32xf32, #tpu.memory_space<vmem>>, vector<8x32xf32>
    %c0_3 = arith.constant 0 : index
    %c0_4 = arith.constant 0 : index
    %2 = vector.load %arg3[%c0_3, %c0_4] : memref<1x32xf32, #tpu.memory_space<vmem>>, vector<1x32xf32>
    %c0_5 = arith.constant 0 : index
    %c0_6 = arith.constant 0 : index
    %3 = vector.load %arg4[%c0_5, %c0_6] : memref<1x32xf32, #tpu.memory_space<vmem>>, vector<1x32xf32>
    %cst = arith.constant dense<0.000000e+00> : vector<8xf32>
    %4 = vector.multi_reduction <add>, %0, %cst [1] : vector<8x32xf32> to vector<8xf32>
    %5 = vector.shape_cast %4 : vector<8xf32> to vector<8x1xf32>
    %cst_7 = arith.constant 3.200000e+01 : f32
    %6 = vector.broadcast %cst_7 : f32 to vector<8x1xf32>
    %7 = arith.divf %5, %6 : vector<8x1xf32>
    %8 = vector.broadcast %7 : vector<8x1xf32> to vector<8x32xf32>
    %9 = arith.subf %0, %8 : vector<8x32xf32>
    %10 = arith.mulf %9, %9 : vector<8x32xf32>
    %cst_8 = arith.constant dense<0.000000e+00> : vector<8xf32>
    %11 = vector.multi_reduction <add>, %10, %cst_8 [1] : vector<8x32xf32> to vector<8xf32>
    %12 = vector.shape_cast %11 : vector<8xf32> to vector<8x1xf32>
    %cst_9 = arith.constant 3.200000e+01 : f32
    %13 = vector.broadcast %cst_9 : f32 to vector<8x1xf32>
    %14 = arith.divf %12, %13 : vector<8x1xf32>
    %15 = vector.broadcast %7 : vector<8x1xf32> to vector<8x32xf32>
    %16 = arith.subf %0, %15 : vector<8x32xf32>
    %cst_10 = arith.constant 9.99999974E-6 : f32
    %17 = vector.broadcast %cst_10 : f32 to vector<8x1xf32>
    %18 = arith.addf %14, %17 : vector<8x1xf32>
    %19 = math.rsqrt %18 : vector<8x1xf32>
    %20 = vector.broadcast %19 : vector<8x1xf32> to vector<8x32xf32>
    %21 = arith.mulf %16, %20 : vector<8x32xf32>
    %22 = vector.broadcast %2 : vector<1x32xf32> to vector<8x32xf32>
    %23 = arith.mulf %21, %22 : vector<8x32xf32>
    %24 = vector.broadcast %3 : vector<1x32xf32> to vector<8x32xf32>
    %25 = arith.addf %23, %24 : vector<8x32xf32>
    %c0_11 = arith.constant 0 : index
    %c0_12 = arith.constant 0 : index
    %26 = vector.load %arg5[%c0_11, %c0_12] : memref<1x32xf32, #tpu.memory_space<vmem>>, vector<1x32xf32>
    %c0_13 = arith.constant 0 : index
    %c0_14 = arith.constant 0 : index
    %27 = vector.load %arg6[%c0_13, %c0_14] : memref<1x32xf32, #tpu.memory_space<vmem>>, vector<1x32xf32>
    %cst_15 = arith.constant dense<0.000000e+00> : vector<8xf32>
    %28 = vector.multi_reduction <add>, %1, %cst_15 [1] : vector<8x32xf32> to vector<8xf32>
    %29 = vector.shape_cast %28 : vector<8xf32> to vector<8x1xf32>
    %cst_16 = arith.constant 3.200000e+01 : f32
    %30 = vector.broadcast %cst_16 : f32 to vector<8x1xf32>
    %31 = arith.divf %29, %30 : vector<8x1xf32>
    %32 = vector.broadcast %31 : vector<8x1xf32> to vector<8x32xf32>
    %33 = arith.subf %1, %32 : vector<8x32xf32>
    %34 = arith.mulf %33, %33 : vector<8x32xf32>
    %cst_17 = arith.constant dense<0.000000e+00> : vector<8xf32>
    %35 = vector.multi_reduction <add>, %34, %cst_17 [1] : vector<8x32xf32> to vector<8xf32>
    %36 = vector.shape_cast %35 : vector<8xf32> to vector<8x1xf32>
    %cst_18 = arith.constant 3.200000e+01 : f32
    %37 = vector.broadcast %cst_18 : f32 to vector<8x1xf32>
    %38 = arith.divf %36, %37 : vector<8x1xf32>
    %39 = vector.broadcast %31 : vector<8x1xf32> to vector<8x32xf32>
    %40 = arith.subf %1, %39 : vector<8x32xf32>
    %cst_19 = arith.constant 9.99999974E-6 : f32
    %41 = vector.broadcast %cst_19 : f32 to vector<8x1xf32>
    %42 = arith.addf %38, %41 : vector<8x1xf32>
    %43 = math.rsqrt %42 : vector<8x1xf32>
    %44 = vector.broadcast %43 : vector<8x1xf32> to vector<8x32xf32>
    %45 = arith.mulf %40, %44 : vector<8x32xf32>
    %46 = vector.broadcast %26 : vector<1x32xf32> to vector<8x32xf32>
    %47 = arith.mulf %45, %46 : vector<8x32xf32>
    %48 = vector.broadcast %27 : vector<1x32xf32> to vector<8x32xf32>
    %49 = arith.addf %47, %48 : vector<8x32xf32>
    %50 = arith.truncf %25 : vector<8x32xf32> to vector<8x32xbf16>
    %51 = arith.truncf %49 : vector<8x32xf32> to vector<8x32xbf16>
    %c0_20 = arith.constant 0 : index
    %c0_21 = arith.constant 0 : index
    %52 = vector.load %arg7[%c0_20, %c0_21] : memref<32x32xbf16, #tpu.memory_space<vmem>>, vector<32x32xbf16>
    %cst_22 = arith.constant dense<0.000000e+00> : vector<8x32xf32>
    %53 = tpu.matmul %50, %52, %cst_22 {dimension_numbers = #tpu.dot_dimension_numbers<[1], [0], [0], [1], [0, 0, 1, 1], [], []>} : vector<8x32xbf16>, vector<32x32xbf16>, vector<8x32xf32> -> vector<8x32xf32>
    %c0_23 = arith.constant 0 : index
    %c0_24 = arith.constant 0 : index
    %54 = vector.load %arg8[%c0_23, %c0_24] : memref<32x32xbf16, #tpu.memory_space<vmem>>, vector<32x32xbf16>
    %cst_25 = arith.constant dense<0.000000e+00> : vector<8x32xf32>
    %55 = tpu.matmul %51, %54, %cst_25 {dimension_numbers = #tpu.dot_dimension_numbers<[1], [0], [0], [1], [0, 0, 1, 1], [], []>} : vector<8x32xbf16>, vector<32x32xbf16>, vector<8x32xf32> -> vector<8x32xf32>
    %c0_26 = arith.constant 0 : index
    %c0_27 = arith.constant 0 : index
    %56 = vector.load %arg9[%c0_26, %c0_27] : memref<32x32xbf16, #tpu.memory_space<vmem>>, vector<32x32xbf16>
    %cst_28 = arith.constant dense<0.000000e+00> : vector<8x32xf32>
    %57 = tpu.matmul %51, %56, %cst_28 {dimension_numbers = #tpu.dot_dimension_numbers<[1], [0], [0], [1], [0, 0, 1, 1], [], []>} : vector<8x32xbf16>, vector<32x32xbf16>, vector<8x32xf32> -> vector<8x32xf32>
    %58 = vector.shape_cast %53 : vector<8x32xf32> to vector<1x8x32xf32>
    %59 = vector.shape_cast %55 : vector<8x32xf32> to vector<1x8x32xf32>
    %60 = vector.shape_cast %57 : vector<8x32xf32> to vector<1x8x32xf32>
    %cst_29 = arith.constant 0.000000e+00 : f32
    %61 = vector.broadcast %cst_29 : f32 to vector<8x32xf32>
    %62 = vector.extract_strided_slice %58 {offsets = [0, 0, 0], sizes = [1, 8, 16], strides = [1, 1, 1]} : vector<1x8x32xf32> to vector<1x8x16xf32>
    %63 = arith.truncf %62 : vector<1x8x16xf32> to vector<1x8x16xbf16>
    %64 = vector.extract_strided_slice %59 {offsets = [0, 0, 0], sizes = [1, 8, 16], strides = [1, 1, 1]} : vector<1x8x32xf32> to vector<1x8x16xf32>
    %65 = arith.truncf %64 : vector<1x8x16xf32> to vector<1x8x16xbf16>
    %66 = vector.extract_strided_slice %60 {offsets = [0, 0, 0], sizes = [1, 8, 16], strides = [1, 1, 1]} : vector<1x8x32xf32> to vector<1x8x16xf32>
    %67 = arith.truncf %66 : vector<1x8x16xf32> to vector<1x8x16xbf16>
    "tpu.trace_start"() <{level = 10 : i32, message = "bid,bjd->bij"}> : () -> ()
    %cst_30 = arith.constant dense<0.000000e+00> : vector<1x8x8xf32>
    %68 = tpu.matmul %63, %65, %cst_30 {dimension_numbers = #tpu.dot_dimension_numbers<[2], [2], [1], [1], [0, 0, 0, 1, 1, 1], [0], [0]>} : vector<1x8x16xbf16>, vector<1x8x16xbf16>, vector<1x8x8xf32> -> vector<1x8x8xf32>
    "tpu.trace_stop"() : () -> ()
    %cst_31 = arith.constant dense<0xFF800000> : vector<1x8xf32>
    %69 = vector.multi_reduction <maximumf>, %68, %cst_31 [2] : vector<1x8x8xf32> to vector<1x8xf32>
    %70 = vector.shape_cast %69 : vector<1x8xf32> to vector<1x8x1xf32>
    %71 = vector.broadcast %70 : vector<1x8x1xf32> to vector<1x8x8xf32>
    %72 = arith.subf %68, %71 : vector<1x8x8xf32>
    %73 = math.exp %72 : vector<1x8x8xf32>
    %cst_32 = arith.constant dense<0.000000e+00> : vector<1x8xf32>
    %74 = vector.multi_reduction <add>, %73, %cst_32 [2] : vector<1x8x8xf32> to vector<1x8xf32>
    %75 = vector.shape_cast %74 : vector<1x8xf32> to vector<1x8x1xf32>
    %76 = tpu.reciprocal %75 {approx = true} : vector<1x8x1xf32> -> vector<1x8x1xf32>
    %77 = vector.broadcast %76 : vector<1x8x1xf32> to vector<1x8x8xf32>
    %78 = arith.mulf %73, %77 : vector<1x8x8xf32>
    %79 = arith.truncf %78 : vector<1x8x8xf32> to vector<1x8x8xbf16>
    "tpu.trace_start"() <{level = 10 : i32, message = "bij,bjd->bid"}> : () -> ()
    %cst_33 = arith.constant dense<0.000000e+00> : vector<1x8x16xf32>
    %80 = tpu.matmul %79, %67, %cst_33 {dimension_numbers = #tpu.dot_dimension_numbers<[2], [1], [1], [2], [0, 0, 0, 1, 1, 2], [0], [0]>} : vector<1x8x8xbf16>, vector<1x8x16xbf16>, vector<1x8x16xf32> -> vector<1x8x16xf32>
    "tpu.trace_stop"() : () -> ()
    %81 = vector.shape_cast %80 : vector<1x8x16xf32> to vector<8x16xf32>
    %82 = arith.truncf %81 : vector<8x16xf32> to vector<8x16xbf16>
    %c0_34 = arith.constant 0 : index
    %c0_35 = arith.constant 0 : index
    %83 = vector.load %arg10[%c0_34, %c0_35] : memref<32x32xbf16, #tpu.memory_space<vmem>>, vector<16x32xbf16>
    %cst_36 = arith.constant dense<0.000000e+00> : vector<8x32xf32>
    %84 = tpu.matmul %82, %83, %cst_36 {dimension_numbers = #tpu.dot_dimension_numbers<[1], [0], [0], [1], [0, 0, 1, 1], [], []>} : vector<8x16xbf16>, vector<16x32xbf16>, vector<8x32xf32> -> vector<8x32xf32>
    %85 = arith.addf %61, %84 : vector<8x32xf32>
    %86 = vector.extract_strided_slice %58 {offsets = [0, 0, 16], sizes = [1, 8, 16], strides = [1, 1, 1]} : vector<1x8x32xf32> to vector<1x8x16xf32>
    %87 = arith.truncf %86 : vector<1x8x16xf32> to vector<1x8x16xbf16>
    %88 = vector.extract_strided_slice %59 {offsets = [0, 0, 16], sizes = [1, 8, 16], strides = [1, 1, 1]} : vector<1x8x32xf32> to vector<1x8x16xf32>
    %89 = arith.truncf %88 : vector<1x8x16xf32> to vector<1x8x16xbf16>
    %90 = vector.extract_strided_slice %60 {offsets = [0, 0, 16], sizes = [1, 8, 16], strides = [1, 1, 1]} : vector<1x8x32xf32> to vector<1x8x16xf32>
    %91 = arith.truncf %90 : vector<1x8x16xf32> to vector<1x8x16xbf16>
    "tpu.trace_start"() <{level = 10 : i32, message = "bid,bjd->bij"}> : () -> ()
    %cst_37 = arith.constant dense<0.000000e+00> : vector<1x8x8xf32>
    %92 = tpu.matmul %87, %89, %cst_37 {dimension_numbers = #tpu.dot_dimension_numbers<[2], [2], [1], [1], [0, 0, 0, 1, 1, 1], [0], [0]>} : vector<1x8x16xbf16>, vector<1x8x16xbf16>, vector<1x8x8xf32> -> vector<1x8x8xf32>
    "tpu.trace_stop"() : () -> ()
    %cst_38 = arith.constant dense<0xFF800000> : vector<1x8xf32>
    %93 = vector.multi_reduction <maximumf>, %92, %cst_38 [2] : vector<1x8x8xf32> to vector<1x8xf32>
    %94 = vector.shape_cast %93 : vector<1x8xf32> to vector<1x8x1xf32>
    %95 = vector.broadcast %94 : vector<1x8x1xf32> to vector<1x8x8xf32>
    %96 = arith.subf %92, %95 : vector<1x8x8xf32>
    %97 = math.exp %96 : vector<1x8x8xf32>
    %cst_39 = arith.constant dense<0.000000e+00> : vector<1x8xf32>
    %98 = vector.multi_reduction <add>, %97, %cst_39 [2] : vector<1x8x8xf32> to vector<1x8xf32>
    %99 = vector.shape_cast %98 : vector<1x8xf32> to vector<1x8x1xf32>
    %100 = tpu.reciprocal %99 {approx = true} : vector<1x8x1xf32> -> vector<1x8x1xf32>
    %101 = vector.broadcast %100 : vector<1x8x1xf32> to vector<1x8x8xf32>
    %102 = arith.mulf %97, %101 : vector<1x8x8xf32>
    %103 = arith.truncf %102 : vector<1x8x8xf32> to vector<1x8x8xbf16>
    "tpu.trace_start"() <{level = 10 : i32, message = "bij,bjd->bid"}> : () -> ()
    %cst_40 = arith.constant dense<0.000000e+00> : vector<1x8x16xf32>
    %104 = tpu.matmul %103, %91, %cst_40 {dimension_numbers = #tpu.dot_dimension_numbers<[2], [1], [1], [2], [0, 0, 0, 1, 1, 2], [0], [0]>} : vector<1x8x8xbf16>, vector<1x8x16xbf16>, vector<1x8x16xf32> -> vector<1x8x16xf32>
    "tpu.trace_stop"() : () -> ()
    %105 = vector.shape_cast %104 : vector<1x8x16xf32> to vector<8x16xf32>
    %106 = arith.truncf %105 : vector<8x16xf32> to vector<8x16xbf16>
    %c16 = arith.constant 16 : index
    %c0_41 = arith.constant 0 : index
    %107 = vector.load %arg10[%c16, %c0_41] : memref<32x32xbf16, #tpu.memory_space<vmem>>, vector<16x32xbf16>
    %cst_42 = arith.constant dense<0.000000e+00> : vector<8x32xf32>
    %108 = tpu.matmul %106, %107, %cst_42 {dimension_numbers = #tpu.dot_dimension_numbers<[1], [0], [0], [1], [0, 0, 1, 1], [], []>} : vector<8x16xbf16>, vector<16x32xbf16>, vector<8x32xf32> -> vector<8x32xf32>
    %109 = arith.addf %85, %108 : vector<8x32xf32>
    %c0_43 = arith.constant 0 : index
    %c0_44 = arith.constant 0 : index
    %110 = vector.load %arg11[%c0_43, %c0_44] : memref<1x32xf32, #tpu.memory_space<vmem>>, vector<1x32xf32>
    %111 = vector.broadcast %110 : vector<1x32xf32> to vector<8x32xf32>
    %112 = arith.addf %109, %111 : vector<8x32xf32>
    %c0_45 = arith.constant 0 : index
    %c0_46 = arith.constant 0 : index
    %113 = vector.load %arg12[%c0_45, %c0_46] : memref<8x32xf32, #tpu.memory_space<vmem>>, vector<8x32xf32>
    tpu.vector_store %arg12[%c0_45, %c0_46], %112 {strides = array<i32>} : memref<8x32xf32, #tpu.memory_space<vmem>>, vector<8x32xf32>,
    return
  }
  func.func @transform_0(%arg0: i32) -> (i32, i32) {
    %c0_i32 = arith.constant 0 : i32
    %c0_i32_0 = arith.constant 0 : i32
    return %arg0, %c0_i32 : i32, i32
  }
  func.func @transform_1(%arg0: i32) -> (i32, i32) {
    %c0_i32 = arith.constant 0 : i32
    %c0_i32_0 = arith.constant 0 : i32
    return %arg0, %c0_i32 : i32, i32
  }
  func.func @transform_2(%arg0: i32) -> (i32, i32) {
    %c0_i32 = arith.constant 0 : i32
    %c0_i32_0 = arith.constant 0 : i32
    %c0_i32_1 = arith.constant 0 : i32
    return %c0_i32, %c0_i32_0 : i32, i32
  }
  func.func @transform_3(%arg0: i32) -> (i32, i32) {
    %c0_i32 = arith.constant 0 : i32
    %c0_i32_0 = arith.constant 0 : i32
    %c0_i32_1 = arith.constant 0 : i32
    return %c0_i32, %c0_i32_0 : i32, i32
  }
  func.func @transform_4(%arg0: i32) -> (i32, i32) {
    %c0_i32 = arith.constant 0 : i32
    %c0_i32_0 = arith.constant 0 : i32
    %c0_i32_1 = arith.constant 0 : i32
    return %c0_i32, %c0_i32_0 : i32, i32
  }
  func.func @transform_5(%arg0: i32) -> (i32, i32) {
    %c0_i32 = arith.constant 0 : i32
    %c0_i32_0 = arith.constant 0 : i32
    %c0_i32_1 = arith.constant 0 : i32
    return %c0_i32, %c0_i32_0 : i32, i32
  }
  func.func @transform_6(%arg0: i32) -> (i32, i32) {
    %c0_i32 = arith.constant 0 : i32
    %c0_i32_0 = arith.constant 0 : i32
    %c0_i32_1 = arith.constant 0 : i32
    return %c0_i32, %c0_i32_0 : i32, i32
  }
  func.func @transform_7(%arg0: i32) -> (i32, i32) {
    %c0_i32 = arith.constant 0 : i32
    %c0_i32_0 = arith.constant 0 : i32
    %c0_i32_1 = arith.constant 0 : i32
    return %c0_i32, %c0_i32_0 : i32, i32
  }
  func.func @transform_8(%arg0: i32) -> (i32, i32) {
    %c0_i32 = arith.constant 0 : i32
    %c0_i32_0 = arith.constant 0 : i32
    %c0_i32_1 = arith.constant 0 : i32
    return %c0_i32, %c0_i32_0 : i32, i32
  }
  func.func @transform_9(%arg0: i32) -> (i32, i32) {
    %c0_i32 = arith.constant 0 : i32
    %c0_i32_0 = arith.constant 0 : i32
    %c0_i32_1 = arith.constant 0 : i32
    return %c0_i32, %c0_i32_0 : i32, i32
  }
  func.func @transform_10(%arg0: i32) -> (i32, i32) {
    %c0_i32 = arith.constant 0 : i32
    %c0_i32_0 = arith.constant 0 : i32
    %c0_i32_1 = arith.constant 0 : i32
    return %c0_i32, %c0_i32_0 : i32, i32
  }
  func.func @transform_11(%arg0: i32) -> (i32, i32) {
    %c0_i32 = arith.constant 0 : i32
    %c0_i32_0 = arith.constant 0 : i32
    return %arg0, %c0_i32 : i32, i32
  }
}

module attributes {stable_mosaic.version = 11 : i64} {
  func.func @_cross_attn_kernel(%arg0: i32, %arg1: memref<8x32xf32, #tpu.memory_space<vmem>>, %arg2: memref<8x32xf32, #tpu.memory_space<vmem>>, %arg3: memref<1x32xf32, #tpu.memory_space<vmem>>, %arg4: memref<1x32xf32, #tpu.memory_space<vmem>>, %arg5: memref<1x32xf32, #tpu.memory_space<vmem>>, %arg6: memref<1x32xf32, #tpu.memory_space<vmem>>, %arg7: memref<32x32xbf16, #tpu.memory_space<vmem>>, %arg8: memref<32x32xbf16, #tpu.memory_space<vmem>>, %arg9: memref<32x32xbf16, #tpu.memory_space<vmem>>, %arg10: memref<32x32xbf16, #tpu.memory_space<vmem>>, %arg11: memref<1x32xf32, #tpu.memory_space<vmem>>, %arg12: memref<8x32xf32, #tpu.memory_space<vmem>>) attributes {dimension_semantics = [#tpu.dimension_semantics<parallel>], iteration_bounds = array<i64: 2>, scalar_prefetch = 0 : i64, scratch_operands = 0 : i64, tpu.core_type = #tpu.core_type<tc>, window_params = [{transform_indices = @transform_0, window_bounds = array<i64: 8, 32>}, {transform_indices = @transform_1, window_bounds = array<i64: 8, 32>}, {pipeline_mode = #tpu.pipeline_mode<synchronous>, transform_indices = @transform_2, window_bounds = array<i64: 1, 32>}, {pipeline_mode = #tpu.pipeline_mode<synchronous>, transform_indices = @transform_3, window_bounds = array<i64: 1, 32>}, {pipeline_mode = #tpu.pipeline_mode<synchronous>, transform_indices = @transform_4, window_bounds = array<i64: 1, 32>}, {pipeline_mode = #tpu.pipeline_mode<synchronous>, transform_indices = @transform_5, window_bounds = array<i64: 1, 32>}, {pipeline_mode = #tpu.pipeline_mode<synchronous>, transform_indices = @transform_6, window_bounds = array<i64: 32, 32>}, {pipeline_mode = #tpu.pipeline_mode<synchronous>, transform_indices = @transform_7, window_bounds = array<i64: 32, 32>}, {pipeline_mode = #tpu.pipeline_mode<synchronous>, transform_indices = @transform_8, window_bounds = array<i64: 32, 32>}, {pipeline_mode = #tpu.pipeline_mode<synchronous>, transform_indices = @transform_9, window_bounds = array<i64: 32, 32>}, {pipeline_mode = #tpu.pipeline_mode<synchronous>, transform_indices = @transform_10, window_bounds = array<i64: 1, 32>}, {transform_indices = @transform_11, window_bounds = array<i64: 8, 32>}]} {
    %c0 = arith.constant 0 : index
    %c0_0 = arith.constant 0 : index
    %0 = vector.load %arg1[%c0, %c0_0] : memref<8x32xf32, #tpu.memory_space<vmem>>, vector<8x32xf32>
    %c0_1 = arith.constant 0 : index
    %c0_2 = arith.constant 0 : index
    %1 = vector.load %arg2[%c0_1, %c0_2] : memref<8x32xf32, #tpu.memory_space<vmem>>, vector<8x32xf32>
    %c0_3 = arith.constant 0 : index
    %c0_4 = arith.constant 0 : index
    %2 = vector.load %arg3[%c0_3, %c0_4] : memref<1x32xf32, #tpu.memory_space<vmem>>, vector<1x32xf32>
    %c0_5 = arith.constant 0 : index
    %c0_6 = arith.constant 0 : index
    %3 = vector.load %arg4[%c0_5, %c0_6] : memref<1x32xf32, #tpu.memory_space<vmem>>, vector<1x32xf32>
    %cst = arith.constant dense<0.000000e+00> : vector<8xf32>
    %4 = vector.multi_reduction <add>, %0, %cst [1] : vector<8x32xf32> to vector<8xf32>
    %5 = vector.shape_cast %4 : vector<8xf32> to vector<8x1xf32>
    %cst_7 = arith.constant 3.200000e+01 : f32
    %6 = vector.broadcast %cst_7 : f32 to vector<8x1xf32>
    %7 = arith.divf %5, %6 : vector<8x1xf32>
    %8 = vector.broadcast %7 : vector<8x1xf32> to vector<8x32xf32>
    %9 = arith.subf %0, %8 : vector<8x32xf32>
    %10 = arith.mulf %9, %9 : vector<8x32xf32>
    %cst_8 = arith.constant dense<0.000000e+00> : vector<8xf32>
    %11 = vector.multi_reduction <add>, %10, %cst_8 [1] : vector<8x32xf32> to vector<8xf32>
    %12 = vector.shape_cast %11 : vector<8xf32> to vector<8x1xf32>
    %cst_9 = arith.constant 3.200000e+01 : f32
    %13 = vector.broadcast %cst_9 : f32 to vector<8x1xf32>
    %14 = arith.divf %12, %13 : vector<8x1xf32>
    %15 = vector.broadcast %7 : vector<8x1xf32> to vector<8x32xf32>
    %16 = arith.subf %0, %15 : vector<8x32xf32>
    %cst_10 = arith.constant 9.99999974E-6 : f32
    %17 = vector.broadcast %cst_10 : f32 to vector<8x1xf32>
    %18 = arith.addf %14, %17 : vector<8x1xf32>
    %19 = math.rsqrt %18 : vector<8x1xf32>
    %20 = vector.broadcast %19 : vector<8x1xf32> to vector<8x32xf32>
    %21 = arith.mulf %16, %20 : vector<8x32xf32>
    %22 = vector.broadcast %2 : vector<1x32xf32> to vector<8x32xf32>
    %23 = arith.mulf %21, %22 : vector<8x32xf32>
    %24 = vector.broadcast %3 : vector<1x32xf32> to vector<8x32xf32>
    %25 = arith.addf %23, %24 : vector<8x32xf32>
    %c0_11 = arith.constant 0 : index
    %c0_12 = arith.constant 0 : index
    %26 = vector.load %arg5[%c0_11, %c0_12] : memref<1x32xf32, #tpu.memory_space<vmem>>, vector<1x32xf32>
    %c0_13 = arith.constant 0 : index
    %c0_14 = arith.constant 0 : index
    %27 = vector.load %arg6[%c0_13, %c0_14] : memref<1x32xf32, #tpu.memory_space<vmem>>, vector<1x32xf32>
    %cst_15 = arith.constant dense<0.000000e+00> : vector<8xf32>
    %28 = vector.multi_reduction <add>, %1, %cst_15 [1] : vector<8x32xf32> to vector<8xf32>
    %29 = vector.shape_cast %28 : vector<8xf32> to vector<8x1xf32>
    %cst_16 = arith.constant 3.200000e+01 : f32
    %30 = vector.broadcast %cst_16 : f32 to vector<8x1xf32>
    %31 = arith.divf %29, %30 : vector<8x1xf32>
    %32 = vector.broadcast %31 : vector<8x1xf32> to vector<8x32xf32>
    %33 = arith.subf %1, %32 : vector<8x32xf32>
    %34 = arith.mulf %33, %33 : vector<8x32xf32>
    %cst_17 = arith.constant dense<0.000000e+00> : vector<8xf32>
    %35 = vector.multi_reduction <add>, %34, %cst_17 [1] : vector<8x32xf32> to vector<8xf32>
    %36 = vector.shape_cast %35 : vector<8xf32> to vector<8x1xf32>
    %cst_18 = arith.constant 3.200000e+01 : f32
    %37 = vector.broadcast %cst_18 : f32 to vector<8x1xf32>
    %38 = arith.divf %36, %37 : vector<8x1xf32>
    %39 = vector.broadcast %31 : vector<8x1xf32> to vector<8x32xf32>
    %40 = arith.subf %1, %39 : vector<8x32xf32>
    %cst_19 = arith.constant 9.99999974E-6 : f32
    %41 = vector.broadcast %cst_19 : f32 to vector<8x1xf32>
    %42 = arith.addf %38, %41 : vector<8x1xf32>
    %43 = math.rsqrt %42 : vector<8x1xf32>
    %44 = vector.broadcast %43 : vector<8x1xf32> to vector<8x32xf32>
    %45 = arith.mulf %40, %44 : vector<8x32xf32>
    %46 = vector.broadcast %26 : vector<1x32xf32> to vector<8x32xf32>
    %47 = arith.mulf %45, %46 : vector<8x32xf32>
    %48 = vector.broadcast %27 : vector<1x32xf32> to vector<8x32xf32>
    %49 = arith.addf %47, %48 : vector<8x32xf32>
    %50 = arith.truncf %25 : vector<8x32xf32> to vector<8x32xbf16>
    %51 = arith.truncf %49 : vector<8x32xf32> to vector<8x32xbf16>
    %c0_20 = arith.constant 0 : index
    %c0_21 = arith.constant 0 : index
    %52 = vector.load %arg7[%c0_20, %c0_21] : memref<32x32xbf16, #tpu.memory_space<vmem>>, vector<32x32xbf16>
    %cst_22 = arith.constant dense<0.000000e+00> : vector<8x32xf32>
    %53 = tpu.matmul %50, %52, %cst_22 {dimension_numbers = #tpu.dot_dimension_numbers<[1], [0], [0], [1], [0, 0, 1, 1], [], []>} : vector<8x32xbf16>, vector<32x32xbf16>, vector<8x32xf32> -> vector<8x32xf32>
    %c0_23 = arith.constant 0 : index
    %c0_24 = arith.constant 0 : index
    %54 = vector.load %arg8[%c0_23, %c0_24] : memref<32x32xbf16, #tpu.memory_space<vmem>>, vector<32x32xbf16>
    %cst_25 = arith.constant dense<0.000000e+00> : vector<8x32xf32>
    %55 = tpu.matmul %51, %54, %cst_25 {dimension_numbers = #tpu.dot_dimension_numbers<[1], [0], [0], [1], [0, 0, 1, 1], [], []>} : vector<8x32xbf16>, vector<32x32xbf16>, vector<8x32xf32> -> vector<8x32xf32>
    %c0_26 = arith.constant 0 : index
    %c0_27 = arith.constant 0 : index
    %56 = vector.load %arg9[%c0_26, %c0_27] : memref<32x32xbf16, #tpu.memory_space<vmem>>, vector<32x32xbf16>
    %cst_28 = arith.constant dense<0.000000e+00> : vector<8x32xf32>
    %57 = tpu.matmul %51, %56, %cst_28 {dimension_numbers = #tpu.dot_dimension_numbers<[1], [0], [0], [1], [0, 0, 1, 1], [], []>} : vector<8x32xbf16>, vector<32x32xbf16>, vector<8x32xf32> -> vector<8x32xf32>
    %58 = vector.shape_cast %53 : vector<8x32xf32> to vector<1x8x32xf32>
    %59 = vector.shape_cast %55 : vector<8x32xf32> to vector<1x8x32xf32>
    %60 = vector.shape_cast %57 : vector<8x32xf32> to vector<1x8x32xf32>
    %cst_29 = arith.constant 0.000000e+00 : f32
    %61 = vector.broadcast %cst_29 : f32 to vector<8x32xf32>
    %62 = vector.extract_strided_slice %58 {offsets = [0, 0, 0], sizes = [1, 8, 16], strides = [1, 1, 1]} : vector<1x8x32xf32> to vector<1x8x16xf32>
    %63 = arith.truncf %62 : vector<1x8x16xf32> to vector<1x8x16xbf16>
    %64 = vector.extract_strided_slice %59 {offsets = [0, 0, 0], sizes = [1, 8, 16], strides = [1, 1, 1]} : vector<1x8x32xf32> to vector<1x8x16xf32>
    %65 = arith.truncf %64 : vector<1x8x16xf32> to vector<1x8x16xbf16>
    %66 = vector.extract_strided_slice %60 {offsets = [0, 0, 0], sizes = [1, 8, 16], strides = [1, 1, 1]} : vector<1x8x32xf32> to vector<1x8x16xf32>
    %67 = arith.truncf %66 : vector<1x8x16xf32> to vector<1x8x16xbf16>
    "tpu.trace_start"() <{level = 10 : i32, message = "bid,bjd->bij"}> : () -> ()
    %cst_30 = arith.constant dense<0.000000e+00> : vector<1x8x8xf32>
    %68 = tpu.matmul %63, %65, %cst_30 {dimension_numbers = #tpu.dot_dimension_numbers<[2], [2], [1], [1], [0, 0, 0, 1, 1, 1], [0], [0]>} : vector<1x8x16xbf16>, vector<1x8x16xbf16>, vector<1x8x8xf32> -> vector<1x8x8xf32>
    "tpu.trace_stop"() : () -> ()
    %cst_31 = arith.constant dense<0xFF800000> : vector<1x8xf32>
    %69 = vector.multi_reduction <maximumf>, %68, %cst_31 [2] : vector<1x8x8xf32> to vector<1x8xf32>
    %70 = vector.shape_cast %69 : vector<1x8xf32> to vector<1x8x1xf32>
    %71 = vector.broadcast %70 : vector<1x8x1xf32> to vector<1x8x8xf32>
    %72 = arith.subf %68, %71 : vector<1x8x8xf32>
    %73 = math.exp %72 : vector<1x8x8xf32>
    %cst_32 = arith.constant dense<0.000000e+00> : vector<1x8xf32>
    %74 = vector.multi_reduction <add>, %73, %cst_32 [2] : vector<1x8x8xf32> to vector<1x8xf32>
    %75 = vector.shape_cast %74 : vector<1x8xf32> to vector<1x8x1xf32>
    %76 = tpu.reciprocal %75 {approx = true} : vector<1x8x1xf32> -> vector<1x8x1xf32>
    %77 = vector.broadcast %76 : vector<1x8x1xf32> to vector<1x8x8xf32>
    %78 = arith.mulf %73, %77 : vector<1x8x8xf32>
    %79 = arith.truncf %78 : vector<1x8x8xf32> to vector<1x8x8xbf16>
    "tpu.trace_start"() <{level = 10 : i32, message = "bij,bjd->bid"}> : () -> ()
    %cst_33 = arith.constant dense<0.000000e+00> : vector<1x8x16xf32>
    %80 = tpu.matmul %79, %67, %cst_33 {dimension_numbers = #tpu.dot_dimension_numbers<[2], [1], [1], [2], [0, 0, 0, 1, 1, 2], [0], [0]>} : vector<1x8x8xbf16>, vector<1x8x16xbf16>, vector<1x8x16xf32> -> vector<1x8x16xf32>
    "tpu.trace_stop"() : () -> ()
    %81 = vector.shape_cast %80 : vector<1x8x16xf32> to vector<8x16xf32>
    %82 = arith.truncf %81 : vector<8x16xf32> to vector<8x16xbf16>
    %c0_34 = arith.constant 0 : index
    %c0_35 = arith.constant 0 : index
    %83 = vector.load %arg10[%c0_34, %c0_35] : memref<32x32xbf16, #tpu.memory_space<vmem>>, vector<16x32xbf16>
    %cst_36 = arith.constant dense<0.000000e+00> : vector<8x32xf32>
    %84 = tpu.matmul %82, %83, %cst_36 {dimension_numbers = #tpu.dot_dimension_numbers<[1], [0], [0], [1], [0, 0, 1, 1], [], []>} : vector<8x16xbf16>, vector<16x32xbf16>, vector<8x32xf32> -> vector<8x32xf32>
    %85 = arith.addf %61, %84 : vector<8x32xf32>
    %86 = vector.extract_strided_slice %58 {offsets = [0, 0, 16], sizes = [1, 8, 16], strides = [1, 1, 1]} : vector<1x8x32xf32> to vector<1x8x16xf32>
    %87 = arith.truncf %86 : vector<1x8x16xf32> to vector<1x8x16xbf16>
    %88 = vector.extract_strided_slice %59 {offsets = [0, 0, 16], sizes = [1, 8, 16], strides = [1, 1, 1]} : vector<1x8x32xf32> to vector<1x8x16xf32>
    %89 = arith.truncf %88 : vector<1x8x16xf32> to vector<1x8x16xbf16>
    %90 = vector.extract_strided_slice %60 {offsets = [0, 0, 16], sizes = [1, 8, 16], strides = [1, 1, 1]} : vector<1x8x32xf32> to vector<1x8x16xf32>
    %91 = arith.truncf %90 : vector<1x8x16xf32> to vector<1x8x16xbf16>
    "tpu.trace_start"() <{level = 10 : i32, message = "bid,bjd->bij"}> : () -> ()
    %cst_37 = arith.constant dense<0.000000e+00> : vector<1x8x8xf32>
    %92 = tpu.matmul %87, %89, %cst_37 {dimension_numbers = #tpu.dot_dimension_numbers<[2], [2], [1], [1], [0, 0, 0, 1, 1, 1], [0], [0]>} : vector<1x8x16xbf16>, vector<1x8x16xbf16>, vector<1x8x8xf32> -> vector<1x8x8xf32>
    "tpu.trace_stop"() : () -> ()
    %cst_38 = arith.constant dense<0xFF800000> : vector<1x8xf32>
    %93 = vector.multi_reduction <maximumf>, %92, %cst_38 [2] : vector<1x8x8xf32> to vector<1x8xf32>
    %94 = vector.shape_cast %93 : vector<1x8xf32> to vector<1x8x1xf32>
    %95 = vector.broadcast %94 : vector<1x8x1xf32> to vector<1x8x8xf32>
    %96 = arith.subf %92, %95 : vector<1x8x8xf32>
    %97 = math.exp %96 : vector<1x8x8xf32>
    %cst_39 = arith.constant dense<0.000000e+00> : vector<1x8xf32>
    %98 = vector.multi_reduction <add>, %97, %cst_39 [2] : vector<1x8x8xf32> to vector<1x8xf32>
    %99 = vector.shape_cast %98 : vector<1x8xf32> to vector<1x8x1xf32>
    %100 = tpu.reciprocal %99 {approx = true} : vector<1x8x1xf32> -> vector<1x8x1xf32>
    %101 = vector.broadcast %100 : vector<1x8x1xf32> to vector<1x8x8xf32>
    %102 = arith.mulf %97, %101 : vector<1x8x8xf32>
    %103 = arith.truncf %102 : vector<1x8x8xf32> to vector<1x8x8xbf16>
    "tpu.trace_start"() <{level = 10 : i32, message = "bij,bjd->bid"}> : () -> ()
    %cst_40 = arith.constant dense<0.000000e+00> : vector<1x8x16xf32>
    %104 = tpu.matmul %103, %91, %cst_40 {dimension_numbers = #tpu.dot_dimension_numbers<[2], [1], [1], [2], [0, 0, 0, 1, 1, 2], [0], [0]>} : vector<1x8x8xbf16>, vector<1x8x16xbf16>, vector<1x8x16xf32> -> vector<1x8x16xf32>
    "tpu.trace_stop"() : () -> ()
    %105 = vector.shape_cast %104 : vector<1x8x16xf32> to vector<8x16xf32>
    %106 = arith.truncf %105 : vector<8x16xf32> to vector<8x16xbf16>
    %c16 = arith.constant 16 : index
    %c0_41 = arith.constant 0 : index
    %107 = vector.load %arg10[%c16, %c0_41] : memref<32x32xbf16, #tpu.memory_space<vmem>>, vector<16x32xbf16>
    %cst_42 = arith.constant dense<0.000000e+00> : vector<8x32xf32>
    %108 = tpu.matmul %106, %107, %cst_42 {dimension_numbers = #tpu.dot_dimension_numbers<[1], [0], [0], [1], [0, 0, 1, 1], [], []>} : vector<8x16xbf16>, vector<16x32xbf16>, vector<8x32xf32> -> vector<8x32xf32>
    %109 = arith.addf %85, %108 : vector<8x32xf32>
    %c0_43 = arith.constant 0 : index
    %c0_44 = arith.constant 0 : index
    %110 = vector.load %arg11[%c0_43, %c0_44] : memref<1x32xf32, #tpu.memory_space<vmem>>, vector<1x32xf32>
    %111 = vector.broadcast %110 : vector<1x32xf32> to vector<8x32xf32>
    %112 = arith.addf %109, %111 : vector<8x32xf32>
    %c0_45 = arith.constant 0 : index
    %c0_46 = arith.constant 0 : index
    %113 = vector.load %arg12[%c0_45, %c0_46] : memref<8x32xf32, #tpu.memory_space<vmem>>, vector<8x32xf32>
    tpu.vector_store %arg12[%c0_45, %c0_46], %112 {strides = array<i32>} : memref<8x32xf32, #tpu.memory_space<vmem>>, vector<8x32xf32>,
    return
  }
  func.func @transform_0(%arg0: i32) -> (i32, i32) {
    %c0_i32 = arith.constant 0 : i32
    %c0_i32_0 = arith.constant 0 : i32
    return %arg0, %c0_i32 : i32, i32
  }
  func.func @transform_1(%arg0: i32) -> (i32, i32) {
    %c0_i32 = arith.constant 0 : i32
    %c0_i32_0 = arith.constant 0 : i32
    return %arg0, %c0_i32 : i32, i32
  }
  func.func @transform_2(%arg0: i32) -> (i32, i32) {
    %c0_i32 = arith.constant 0 : i32
    %c0_i32_0 = arith.constant 0 : i32
    %c0_i32_1 = arith.constant 0 : i32
    return %c0_i32, %c0_i32_0 : i32, i32
  }
  func.func @transform_3(%arg0: i32) -> (i32, i32) {
    %c0_i32 = arith.constant 0 : i32
    %c0_i32_0 = arith.constant 0 : i32
    %c0_i32_1 = arith.constant 0 : i32
    return %c0_i32, %c0_i32_0 : i32, i32
  }
  func.func @transform_4(%arg0: i32) -> (i32, i32) {
    %c0_i32 = arith.constant 0 : i32
    %c0_i32_0 = arith.constant 0 : i32
    %c0_i32_1 = arith.constant 0 : i32
    return %c0_i32, %c0_i32_0 : i32, i32
  }
  func.func @transform_5(%arg0: i32) -> (i32, i32) {
    %c0_i32 = arith.constant 0 : i32
    %c0_i32_0 = arith.constant 0 : i32
    %c0_i32_1 = arith.constant 0 : i32
    return %c0_i32, %c0_i32_0 : i32, i32
  }
  func.func @transform_6(%arg0: i32) -> (i32, i32) {
    %c0_i32 = arith.constant 0 : i32
    %c0_i32_0 = arith.constant 0 : i32
    %c0_i32_1 = arith.constant 0 : i32
    return %c0_i32, %c0_i32_0 : i32, i32
  }
  func.func @transform_7(%arg0: i32) -> (i32, i32) {
    %c0_i32 = arith.constant 0 : i32
    %c0_i32_0 = arith.constant 0 : i32
    %c0_i32_1 = arith.constant 0 : i32
    return %c0_i32, %c0_i32_0 : i32, i32
  }
  func.func @transform_8(%arg0: i32) -> (i32, i32) {
    %c0_i32 = arith.constant 0 : i32
    %c0_i32_0 = arith.constant 0 : i32
    %c0_i32_1 = arith.constant 0 : i32
    return %c0_i32, %c0_i32_0 : i32, i32
  }
  func.func @transform_9(%arg0: i32) -> (i32, i32) {
    %c0_i32 = arith.constant 0 : i32
    %c0_i32_0 = arith.constant 0 : i32
    %c0_i32_1 = arith.constant 0 : i32
    return %c0_i32, %c0_i32_0 : i32, i32
  }
  func.func @transform_10(%arg0: i32) -> (i32, i32) {
    %c0_i32 = arith.constant 0 : i32
    %c0_i32_0 = arith.constant 0 : i32
    %c0_i32_1 = arith.constant 0 : i32
    return %c0_i32, %c0_i32_0 : i32, i32
  }
  func.func @transform_11(%arg0: i32) -> (i32, i32) {
    %c0_i32 = arith.constant 0 : i32
    %c0_i32_0 = arith.constant 0 : i32
    return %arg0, %c0_i32 : i32, i32
  }
}

</mosaic_0001>

<llo_original>
// kernel: tpu_custom_call.1
$region0: #{tpu_custom_call.1}
  #allocation0 [shape = 'u32[]', space=smem, size = 0x4, offset = 0x4, fixed_abs, tag = 'smem constant byte address 0x4 - core index']
  #allocation1 [shape = 'u32[144,128]{1,0:T(1,128)}', space=vmem, size = 0x12000, scoped, tag = 'internal scratch']
  %s0 = inlined_call_operand.hbm [shape: f32[16,32], index: 0, kind: input, shape index: {}]
  %s1 = inlined_call_operand.hbm [shape: f32[16,32], index: 1, kind: input, shape index: {}]
  %s2 = inlined_call_operand.hbm [shape: f32[1,32], index: 2, kind: input, shape index: {}]
  %s3 = inlined_call_operand.hbm [shape: f32[1,32], index: 3, kind: input, shape index: {}]
  %s4 = inlined_call_operand.hbm [shape: f32[1,32], index: 4, kind: input, shape index: {}]
  %s5 = inlined_call_operand.hbm [shape: f32[1,32], index: 5, kind: input, shape index: {}]
  %s6 = inlined_call_operand.hbm [shape: bf16[32,32], index: 6, kind: input, shape index: {}]
  %s7 = inlined_call_operand.hbm [shape: bf16[32,32], index: 7, kind: input, shape index: {}]
  %s8 = inlined_call_operand.hbm [shape: bf16[32,32], index: 8, kind: input, shape index: {}]
  %s9 = inlined_call_operand.vmem [shape: bf16[32,32], index: 9, kind: input, shape index: {}]
  %s10 = inlined_call_operand.vmem [shape: f32[1,32], index: 10, kind: input, shape index: {}]
  %s11 = inlined_call_operand.hbm [shape: f32[16,32], index: 11, kind: output, shape index: {}]
  %s12 = sld [smem:[#allocation0]]
  $region113: #{tpu_custom_call.1} parent=0
    _
  %s14 = ssub.s32 1, %s12
  %s15 = scalar_select 0, %s14, %s12
  $region1: #{tpu_custom_call.1} parent=0
    #allocation2 [shape = 'u8[8192]{0}', space=vmem, size = 0x2000, scoped, tag = 'input window, operand 0']
    #allocation3 [shape = 's32[2]{0}', space=sflag, size = 0x8, scoped, tag = 'scoped memory for tpu_custom_call.1']
    #allocation4 [shape = 's32[2]{0}', space=sflag, size = 0x8, scoped, tag = 'scoped memory for tpu_custom_call.1']
    #allocation5 [shape = 'u8[8192]{0}', space=vmem, size = 0x2000, scoped, tag = 'input window, operand 1']
    #allocation6 [shape = 's32[2]{0}', space=sflag, size = 0x8, scoped, tag = 'scoped memory for tpu_custom_call.1']
    #allocation7 [shape = 'u8[512]{0}', space=vmem, size = 0x400, scoped, tag = 'input window, operand 2, single buffered']
    #allocation8 [shape = 'u8[512]{0}', space=vmem, size = 0x400, scoped, tag = 'input window, operand 3, single buffered']
    #allocation9 [shape = 's32[1]{0}', space=sflag, size = 0x4, scoped, tag = 'scoped memory for tpu_custom_call.1']
    #allocation10 [shape = 'u8[512]{0}', space=vmem, size = 0x400, scoped, tag = 'input window, operand 4, single buffered']
    #allocation11 [shape = 'u8[512]{0}', space=vmem, size = 0x400, scoped, tag = 'input window, operand 5, single buffered']
    #allocation12 [shape = 's32[1]{0}', space=sflag, size = 0x4, scoped, tag = 'scoped memory for tpu_custom_call.1']
    #allocation13 [shape = 'u8[8192]{0}', space=vmem, size = 0x2000, scoped, tag = 'input window, operand 6, single buffered']
    #allocation14 [shape = 'u8[8192]{0}', space=vmem, size = 0x2000, scoped, tag = 'input window, operand 7, single buffered']
    #allocation15 [shape = 's32[1]{0}', space=sflag, size = 0x4, scoped, tag = 'scoped memory for tpu_custom_call.1']
    #allocation16 [shape = 'u8[8192]{0}', space=vmem, size = 0x2000, scoped, tag = 'input window, operand 8, single buffered']
    #allocation17 [shape = 'u8[8192]{0}', space=vmem, size = 0x2000, scoped, tag = 'output window, operand 0']
    %16 = vsyncpa [#allocation3], 0
    %s17 = scalar_lea.sflag [#allocation3], 1
    %18 = vsyncpa %s17, 0
    %19 = vsyncpa [#allocation6], 0
    %s20 = scalar_lea.sflag [#allocation6], 1
    %21 = vsyncpa %s20, 0
    %22 = vsyncpa [#allocation9], 0
    %23 = vsyncpa [#allocation12], 0
    %24 = vsyncpa [#allocation15], 0
    %25 = vsyncpa [#allocation4], 0
    %s26 = scalar_lea.sflag [#allocation4], 1
    %27 = vsyncpa %s26, 0
    loop: start=0, step=1, limit=4
    $region2: #{tpu_custom_call.1} parent=1 // loop_pre_header
      _
    $region3: #{tpu_custom_call.1} parent=1 // loop_header
      %s29 = sphi 0, %s33
      %p30 = scmp.ge.s32.totalorder %s29, 4
      %s39 = sphi 0, %s41
      %s42 = sphi 0, %s39
      %s43 = sphi 0, %s42
      %s59 = sphi 0, %s43
      %s65 = sphi 0, %s67
      %s68 = sphi 0, %s65
      %s69 = sphi 0, %s68
      %s85 = sphi 0, %s69
      %s89 = sphi 0, %s89
      %s91 = sphi 0, %s89
      %s92 = sphi 0, %s91
      %s106 = sphi 0, %s92
      %s110 = sphi 0, %s110
      %s112 = sphi 0, %s110
      %s113 = sphi 0, %s112
      %s127 = sphi 0, %s113
      %s131 = sphi 0, %s131
      %s133 = sphi 0, %s131
      %s134 = sphi 0, %s133
      %s148 = sphi 0, %s134
      %s152 = sphi 0, %s152
      %s154 = sphi 0, %s152
      %s155 = sphi 0, %s154
      %s169 = sphi 0, %s155
      %s173 = sphi 0, %s173
      %s175 = sphi 0, %s173
      %s176 = sphi 0, %s175
      %s190 = sphi 0, %s176
      %s194 = sphi 0, %s194
      %s196 = sphi 0, %s194
      %s197 = sphi 0, %s196
      %s211 = sphi 0, %s197
      %s215 = sphi 0, %s215
      %s217 = sphi 0, %s215
      %s218 = sphi 0, %s217
      %s232 = sphi 0, %s218
      %s236 = sphi 0, %s236
      %s238 = sphi 0, %s236
      %s239 = sphi 0, %s238
      %s253 = sphi 0, %s239
      %s257 = sphi 0, %s257
      %s259 = sphi 0, %s257
      %s260 = sphi 0, %s259
      %s274 = sphi 0, %s260
      %s280 = sphi 0, %s282
      %s283 = sphi 0, %s280
      %s284 = sphi 0, %s283
      %s300 = sphi 0, %s284
    $region4: #{tpu_custom_call.1} parent=1 // loop_header_branch
      %32 = sbr.rel (%p30) target = $region8
    $region5: #{tpu_custom_call.1} parent=1 // loop_body
      %s34 = ssub.s32 %s29, 1
      %s35 = ssub.s32 %s29, 2
      %s36 = sadd.s32 %s29, 1
      %s37 = ssub.s32 %s29, %s36
      %p38 = scmp.eq.s32.totalorder %s37, 0
      %s40 = sadd.s32 %s39, 1
      %s41 = scalar_select %p38, %s39, %s40
      %p44 = pneg %p38
      %p45 = scmp.eq.s32.totalorder %s29, 1
      %p46 = por %p44, %p45
      %p47 = scmp.ne.s32.totalorder %s39, %s42
      %p48 = scmp.eq.s32.totalorder %s29, 0
      %p49 = por %p47, %p48
      %p50 = scmp.ne.s32.totalorder %s39, %s42
      %p51 = scmp.eq.s32.totalorder %s34, 1
      %p52 = por %p50, %p51
      %p53 = scmp.ne.s32.totalorder %s42, %s43
      %p54 = scmp.eq.s32.totalorder %s34, 0
      %p55 = por %p53, %p54
      %p56 = scmp.ne.s32.totalorder %s42, %s43
      %p57 = scmp.eq.s32.totalorder %s35, 1
      %p58 = por %p56, %p57
      %p60 = scmp.ne.s32.totalorder %s43, %s59
      %p61 = scmp.eq.s32.totalorder %s35, 0
      %p62 = por %p60, %p61
      %s63 = ssub.s32 %s29, %s36
      %p64 = scmp.eq.s32.totalorder %s63, 0
      %s66 = sadd.s32 %s65, 1
      %s67 = scalar_select %p64, %s65, %s66
      %p70 = pneg %p64
      %p71 = scmp.eq.s32.totalorder %s29, 1
      %p72 = por %p70, %p71
      %p73 = scmp.ne.s32.totalorder %s65, %s68
      %p74 = scmp.eq.s32.totalorder %s29, 0
      %p75 = por %p73, %p74
      %p76 = scmp.ne.s32.totalorder %s65, %s68
      %p77 = scmp.eq.s32.totalorder %s34, 1
      %p78 = por %p76, %p77
      %p79 = scmp.ne.s32.totalorder %s68, %s69
      %p80 = scmp.eq.s32.totalorder %s34, 0
      %p81 = por %p79, %p80
      %p82 = scmp.ne.s32.totalorder %s68, %s69
      %p83 = scmp.eq.s32.totalorder %s35, 1
      %p84 = por %p82, %p83
      %p86 = scmp.ne.s32.totalorder %s69, %s85
      %p87 = scmp.eq.s32.totalorder %s35, 0
      %p88 = por %p86, %p87
      %s90 = sadd.s32 %s89, 1
      %p93 = scmp.eq.s32.totalorder %s29, 1
      %p94 = scmp.ne.s32.totalorder %s89, %s91
      %p95 = scmp.eq.s32.totalorder %s29, 0
      %p96 = por %p94, %p95
      %p97 = scmp.ne.s32.totalorder %s89, %s91
      %p98 = scmp.eq.s32.totalorder %s34, 1
      %p99 = por %p97, %p98
      %p100 = scmp.ne.s32.totalorder %s91, %s92
      %p101 = scmp.eq.s32.totalorder %s34, 0
      %p102 = por %p100, %p101
      %p103 = scmp.ne.s32.totalorder %s91, %s92
      %p104 = scmp.eq.s32.totalorder %s35, 1
      %p105 = por %p103, %p104
      %p107 = scmp.ne.s32.totalorder %s92, %s106
      %p108 = scmp.eq.s32.totalorder %s35, 0
      %p109 = por %p107, %p108
      %s111 = sadd.s32 %s110, 1
      %p114 = scmp.eq.s32.totalorder %s29, 1
      %p115 = scmp.ne.s32.totalorder %s110, %s112
      %p116 = scmp.eq.s32.totalorder %s29, 0
      %p117 = por %p115, %p116
      %p118 = scmp.ne.s32.totalorder %s110, %s112
      %p119 = scmp.eq.s32.totalorder %s34, 1
      %p120 = por %p118, %p119
      %p121 = scmp.ne.s32.totalorder %s112, %s113
      %p122 = scmp.eq.s32.totalorder %s34, 0
      %p123 = por %p121, %p122
      %p124 = scmp.ne.s32.totalorder %s112, %s113
      %p125 = scmp.eq.s32.totalorder %s35, 1
      %p126 = por %p124, %p125
      %p128 = scmp.ne.s32.totalorder %s113, %s127
      %p129 = scmp.eq.s32.totalorder %s35, 0
      %p130 = por %p128, %p129
      %s132 = sadd.s32 %s131, 1
      %p135 = scmp.eq.s32.totalorder %s29, 1
      %p136 = scmp.ne.s32.totalorder %s131, %s133
      %p137 = scmp.eq.s32.totalorder %s29, 0
      %p138 = por %p136, %p137
      %p139 = scmp.ne.s32.totalorder %s131, %s133
      %p140 = scmp.eq.s32.totalorder %s34, 1
      %p141 = por %p139, %p140
      %p142 = scmp.ne.s32.totalorder %s133, %s134
      %p143 = scmp.eq.s32.totalorder %s34, 0
      %p144 = por %p142, %p143
      %p145 = scmp.ne.s32.totalorder %s133, %s134
      %p146 = scmp.eq.s32.totalorder %s35, 1
      %p147 = por %p145, %p146
      %p149 = scmp.ne.s32.totalorder %s134, %s148
      %p150 = scmp.eq.s32.totalorder %s35, 0
      %p151 = por %p149, %p150
      %s153 = sadd.s32 %s152, 1
      %p156 = scmp.eq.s32.totalorder %s29, 1
      %p157 = scmp.ne.s32.totalorder %s152, %s154
      %p158 = scmp.eq.s32.totalorder %s29, 0
      %p159 = por %p157, %p158
      %p160 = scmp.ne.s32.totalorder %s152, %s154
      %p161 = scmp.eq.s32.totalorder %s34, 1
      %p162 = por %p160, %p161
      %p163 = scmp.ne.s32.totalorder %s154, %s155
      %p164 = scmp.eq.s32.totalorder %s34, 0
      %p165 = por %p163, %p164
      %p166 = scmp.ne.s32.totalorder %s154, %s155
      %p167 = scmp.eq.s32.totalorder %s35, 1
      %p168 = por %p166, %p167
      %p170 = scmp.ne.s32.totalorder %s155, %s169
      %p171 = scmp.eq.s32.totalorder %s35, 0
      %p172 = por %p170, %p171
      %s174 = sadd.s32 %s173, 1
      %p177 = scmp.eq.s32.totalorder %s29, 1
      %p178 = scmp.ne.s32.totalorder %s173, %s175
      %p179 = scmp.eq.s32.totalorder %s29, 0
      %p180 = por %p178, %p179
      %p181 = scmp.ne.s32.totalorder %s173, %s175
      %p182 = scmp.eq.s32.totalorder %s34, 1
      %p183 = por %p181, %p182
      %p184 = scmp.ne.s32.totalorder %s175, %s176
      %p185 = scmp.eq.s32.totalorder %s34, 0
      %p186 = por %p184, %p185
      %p187 = scmp.ne.s32.totalorder %s175, %s176
      %p188 = scmp.eq.s32.totalorder %s35, 1
      %p189 = por %p187, %p188
      %p191 = scmp.ne.s32.totalorder %s176, %s190
      %p192 = scmp.eq.s32.totalorder %s35, 0
      %p193 = por %p191, %p192
      %s195 = sadd.s32 %s194, 1
      %p198 = scmp.eq.s32.totalorder %s29, 1
      %p199 = scmp.ne.s32.totalorder %s194, %s196
      %p200 = scmp.eq.s32.totalorder %s29, 0
      %p201 = por %p199, %p200
      %p202 = scmp.ne.s32.totalorder %s194, %s196
      %p203 = scmp.eq.s32.totalorder %s34, 1
      %p204 = por %p202, %p203
      %p205 = scmp.ne.s32.totalorder %s196, %s197
      %p206 = scmp.eq.s32.totalorder %s34, 0
      %p207 = por %p205, %p206
      %p208 = scmp.ne.s32.totalorder %s196, %s197
      %p209 = scmp.eq.s32.totalorder %s35, 1
      %p210 = por %p208, %p209
      %p212 = scmp.ne.s32.totalorder %s197, %s211
      %p213 = scmp.eq.s32.totalorder %s35, 0
      %p214 = por %p212, %p213
      %s216 = sadd.s32 %s215, 1
      %p219 = scmp.eq.s32.totalorder %s29, 1
      %p220 = scmp.ne.s32.totalorder %s215, %s217
      %p221 = scmp.eq.s32.totalorder %s29, 0
      %p222 = por %p220, %p221
      %p223 = scmp.ne.s32.totalorder %s215, %s217
      %p224 = scmp.eq.s32.totalorder %s34, 1
      %p225 = por %p223, %p224
      %p226 = scmp.ne.s32.totalorder %s217, %s218
      %p227 = scmp.eq.s32.totalorder %s34, 0
      %p228 = por %p226, %p227
      %p229 = scmp.ne.s32.totalorder %s217, %s218
      %p230 = scmp.eq.s32.totalorder %s35, 1
      %p231 = por %p229, %p230
      %p233 = scmp.ne.s32.totalorder %s218, %s232
      %p234 = scmp.eq.s32.totalorder %s35, 0
      %p235 = por %p233, %p234
      %s237 = sadd.s32 %s236, 1
      %p240 = scmp.eq.s32.totalorder %s29, 1
      %p241 = scmp.ne.s32.totalorder %s236, %s238
      %p242 = scmp.eq.s32.totalorder %s29, 0
      %p243 = por %p241, %p242
      %p244 = scmp.ne.s32.totalorder %s236, %s238
      %p245 = scmp.eq.s32.totalorder %s34, 1
      %p246 = por %p244, %p245
      %p247 = scmp.ne.s32.totalorder %s238, %s239
      %p248 = scmp.eq.s32.totalorder %s34, 0
      %p249 = por %p247, %p248
      %p250 = scmp.ne.s32.totalorder %s238, %s239
      %p251 = scmp.eq.s32.totalorder %s35, 1
      %p252 = por %p250, %p251
      %p254 = scmp.ne.s32.totalorder %s239, %s253
      %p255 = scmp.eq.s32.totalorder %s35, 0
      %p256 = por %p254, %p255
      %s258 = sadd.s32 %s257, 1
      %p261 = scmp.eq.s32.totalorder %s29, 1
      %p262 = scmp.ne.s32.totalorder %s257, %s259
      %p263 = scmp.eq.s32.totalorder %s29, 0
      %p264 = por %p262, %p263
      %p265 = scmp.ne.s32.totalorder %s257, %s259
      %p266 = scmp.eq.s32.totalorder %s34, 1
      %p267 = por %p265, %p266
      %p268 = scmp.ne.s32.totalorder %s259, %s260
      %p269 = scmp.eq.s32.totalorder %s34, 0
      %p270 = por %p268, %p269
      %p271 = scmp.ne.s32.totalorder %s259, %s260
      %p272 = scmp.eq.s32.totalorder %s35, 1
      %p273 = por %p271, %p272
      %p275 = scmp.ne.s32.totalorder %s260, %s274
      %p276 = scmp.eq.s32.totalorder %s35, 0
      %p277 = por %p275, %p276
      %s278 = ssub.s32 %s29, %s36
      %p279 = scmp.eq.s32.totalorder %s278, 0
      %s281 = sadd.s32 %s280, 1
      %s282 = scalar_select %p279, %s280, %s281
      %p285 = pneg %p279
      %p286 = scmp.eq.s32.totalorder %s29, 1
      %p287 = por %p285, %p286
      %p288 = scmp.ne.s32.totalorder %s280, %s283
      %p289 = scmp.eq.s32.totalorder %s29, 0
      %p290 = por %p288, %p289
      %p291 = scmp.ne.s32.totalorder %s280, %s283
      %p292 = scmp.eq.s32.totalorder %s34, 1
      %p293 = por %p291, %p292
      %p294 = scmp.ne.s32.totalorder %s283, %s284
      %p295 = scmp.eq.s32.totalorder %s34, 0
      %p296 = por %p294, %p295
      %p297 = scmp.ne.s32.totalorder %s283, %s284
      %p298 = scmp.eq.s32.totalorder %s35, 1
      %p299 = por %p297, %p298
      %p301 = scmp.ne.s32.totalorder %s284, %s300
      %p302 = scmp.eq.s32.totalorder %s35, 0
      %p303 = por %p301, %p302
      %p304 = scmp.le.s32.totalorder 1, %s29
      %p305 = scmp.lt.s32.totalorder %s29, 3
      %p306 = pnand %p304, %p305
      %p307 = pneg %p306
      // Predicated region
      $region9: #{tpu_custom_call.1} parent=5 // pred_check
        _
      $region10: #{tpu_custom_call.1} parent=5 // pred_check_branch
        %309 = sbr.rel (%p306) target = $region12
      $region11: #{tpu_custom_call.1} parent=5 // pred_region
        %s310 = ssub.s32 %s29, 1
        // Predicated region
        $region13: #{tpu_custom_call.1} parent=11 // pred_check
          %p311 = pneg %p102
        $region14: #{tpu_custom_call.1} parent=11 // pred_check_branch
          %313 = sbr.rel (%p311) target = $region16
        $region15: #{tpu_custom_call.1} parent=11 // pred_region
          %s315 = ssub.s32 16, 16
          %316 = vsyncadd [#allocation6], %s315
          %s318 = sshll.u32 [#allocation7], 4
          %s319 = int_to_ptr.vmem [resolvable:$true] %s318
          %321 = dma.hbm_to_vmem [thread:$0]  %s2, 16, %s319, [#allocation6]
        $region16: #{tpu_custom_call.1} parent=11 // pred_fallthru
          _
        // Predicated region
        $region17: #{tpu_custom_call.1} parent=11 // pred_check
          %p322 = pneg %p123
        $region18: #{tpu_custom_call.1} parent=11 // pred_check_branch
          %324 = sbr.rel (%p322) target = $region20
        $region19: #{tpu_custom_call.1} parent=11 // pred_region
          %s326 = ssub.s32 16, 16
          %327 = vsyncadd [#allocation9], %s326
          %s329 = sshll.u32 [#allocation8], 4
          %s330 = int_to_ptr.vmem [resolvable:$true] %s329
          %332 = dma.hbm_to_vmem [thread:$0]  %s3, 16, %s330, [#allocation9]
        $region20: #{tpu_custom_call.1} parent=11 // pred_fallthru
          _
        // Predicated region
        $region21: #{tpu_custom_call.1} parent=11 // pred_check
          %p333 = pneg %p144
        $region22: #{tpu_custom_call.1} parent=11 // pred_check_branch
          %335 = sbr.rel (%p333) target = $region24
        $region23: #{tpu_custom_call.1} parent=11 // pred_region
          %s337 = ssub.s32 16, 16
          %338 = vsyncadd [#allocation9], %s337
          %s340 = sshll.u32 [#allocation10], 4
          %s341 = int_to_ptr.vmem [resolvable:$true] %s340
          %343 = dma.hbm_to_vmem [thread:$0]  %s4, 16, %s341, [#allocation9]
        $region24: #{tpu_custom_call.1} parent=11 // pred_fallthru
          _
        // Predicated region
        $region25: #{tpu_custom_call.1} parent=11 // pred_check
          %p344 = pneg %p165
        $region26: #{tpu_custom_call.1} parent=11 // pred_check_branch
          %346 = sbr.rel (%p344) target = $region28
        $region27: #{tpu_custom_call.1} parent=11 // pred_region
          %s348 = ssub.s32 16, 16
          %349 = vsyncadd [#allocation12], %s348
          %s351 = sshll.u32 [#allocation11], 4
          %s352 = int_to_ptr.vmem [resolvable:$true] %s351
          %354 = dma.hbm_to_vmem [thread:$0]  %s5, 16, %s352, [#allocation12]
        $region28: #{tpu_custom_call.1} parent=11 // pred_fallthru
          _
        // Predicated region
        $region29: #{tpu_custom_call.1} parent=11 // pred_check
          %p355 = pneg %p186
        $region30: #{tpu_custom_call.1} parent=11 // pred_check_branch
          %357 = sbr.rel (%p355) target = $region32
        $region31: #{tpu_custom_call.1} parent=11 // pred_region
          %s359 = ssub.s32 256, 256
          %360 = vsyncadd [#allocation12], %s359
          %s361 = sshll.u32 [#allocation13], 4
          %s362 = int_to_ptr.vmem [resolvable:$true] %s361
          %367 = dma.hbm_to_vmem [thread:$0]  %s6, 256, %s362, [#allocation12], 64, 64, 4
        $region32: #{tpu_custom_call.1} parent=11 // pred_fallthru
          _
        // Predicated region
        $region33: #{tpu_custom_call.1} parent=11 // pred_check
          %p368 = pneg %p207
        $region34: #{tpu_custom_call.1} parent=11 // pred_check_branch
          %370 = sbr.rel (%p368) target = $region36
        $region35: #{tpu_custom_call.1} parent=11 // pred_region
          %s372 = ssub.s32 256, 256
          %373 = vsyncadd [#allocation15], %s372
          %s374 = sshll.u32 [#allocation14], 4
          %s375 = int_to_ptr.vmem [resolvable:$true] %s374
          %380 = dma.hbm_to_vmem [thread:$0]  %s7, 256, %s375, [#allocation15], 64, 64, 4
        $region36: #{tpu_custom_call.1} parent=11 // pred_fallthru
          _
        // Predicated region
        $region37: #{tpu_custom_call.1} parent=11 // pred_check
          %p381 = pneg %p228
        $region38: #{tpu_custom_call.1} parent=11 // pred_check_branch
          %383 = sbr.rel (%p381) target = $region40
        $region39: #{tpu_custom_call.1} parent=11 // pred_region
          %s385 = ssub.s32 256, 256
          %386 = vsyncadd [#allocation15], %s385
          %s387 = sshll.u32 [#allocation16], 4
          %s388 = int_to_ptr.vmem [resolvable:$true] %s387
          %393 = dma.hbm_to_vmem [thread:$0]  %s8, 256, %s388, [#allocation15], 64, 64, 4
        $region40: #{tpu_custom_call.1} parent=11 // pred_fallthru
          _
        // Predicated region
        $region41: #{tpu_custom_call.1} parent=11 // pred_check
          %p394 = pneg %p249
        $region42: #{tpu_custom_call.1} parent=11 // pred_check_branch
          %396 = sbr.rel (%p394) target = $region44
        $region43: #{tpu_custom_call.1} parent=11 // pred_region
          _
        $region44: #{tpu_custom_call.1} parent=11 // pred_fallthru
          _
        // Predicated region
        $region45: #{tpu_custom_call.1} parent=11 // pred_check
          %p397 = pneg %p270
        $region46: #{tpu_custom_call.1} parent=11 // pred_check_branch
          %399 = sbr.rel (%p397) target = $region48
        $region47: #{tpu_custom_call.1} parent=11 // pred_region
          _
        $region48: #{tpu_custom_call.1} parent=11 // pred_fallthru
          _
      $region12: #{tpu_custom_call.1} parent=5 // pred_fallthru
        _
      %p400 = scmp.lt.s32.totalorder %s29, 2
      // Predicated region
      $region49: #{tpu_custom_call.1} parent=5 // pred_check
        %p401 = pneg %p400
      $region50: #{tpu_custom_call.1} parent=5 // pred_check_branch
        %403 = sbr.rel (%p401) target = $region52
      $region51: #{tpu_custom_call.1} parent=5 // pred_region
        // Predicated region
        $region53: #{tpu_custom_call.1} parent=51 // pred_check
          %p404 = pneg %p49
        $region54: #{tpu_custom_call.1} parent=51 // pred_check_branch
          %406 = sbr.rel (%p404) target = $region56
        $region55: #{tpu_custom_call.1} parent=51 // pred_region
          %s407 = sand.u32 %s39, 1
          %s408 = scalar_lea.sflag [#allocation3], %s407
          %s409 = sand.u32 %s39, 1
          %s410 = smul.addr %s409, 8
          %s411 = scalar_lea.vmem [#allocation2], %s410
          %s413 = ssub.s32 128, 128
          %414 = vsyncadd %s408, %s413
          %s415 = smul.addr %s29, 128
          %s416 = scalar_lea.hbm %s0, %s415
          %s418 = sshll.u32 %s411, 4
          %s419 = int_to_ptr.vmem [resolvable:$true] %s418
          %421 = dma.hbm_to_vmem [thread:$0]  %s416, 128, %s419, %s408
        $region56: #{tpu_custom_call.1} parent=51 // pred_fallthru
          _
        // Predicated region
        $region57: #{tpu_custom_call.1} parent=51 // pred_check
          %p422 = pneg %p75
        $region58: #{tpu_custom_call.1} parent=51 // pred_check_branch
          %424 = sbr.rel (%p422) target = $region60
        $region59: #{tpu_custom_call.1} parent=51 // pred_region
          %s425 = sand.u32 %s29, 1
          %s426 = scalar_lea.sflag [#allocation6], %s425
          %s427 = sand.u32 %s65, 1
          %s428 = smul.addr %s427, 8
          %s429 = scalar_lea.vmem [#allocation5], %s428
          %s431 = ssub.s32 128, 128
          %432 = vsyncadd %s426, %s431
          %s433 = smul.addr %s29, 128
          %s434 = scalar_lea.hbm %s1, %s433
          %s436 = sshll.u32 %s429, 4
          %s437 = int_to_ptr.vmem [resolvable:$true] %s436
          %439 = dma.hbm_to_vmem [thread:$0]  %s434, 128, %s437, %s426
        $region60: #{tpu_custom_call.1} parent=51 // pred_fallthru
          _
      $region52: #{tpu_custom_call.1} parent=5 // pred_fallthru
        _
      %p440 = scmp.le.s32.totalorder 1, %s29
      %p441 = scmp.lt.s32.totalorder %s29, 3
      %p442 = pnand %p440, %p441
      %p443 = pneg %p442
      // Predicated region
      $region61: #{tpu_custom_call.1} parent=5 // pred_check
        _
      $region62: #{tpu_custom_call.1} parent=5 // pred_check_branch
        %445 = sbr.rel (%p442) target = $region64
      $region63: #{tpu_custom_call.1} parent=5 // pred_region
        %s446 = ssub.s32 %s29, 1
        %s447 = sand.u32 %s42, 1
        %s448 = scalar_lea.sflag [#allocation3], %s447
        %s449 = sand.u32 %s42, 1
        %s450 = smul.addr %s449, 8
        %s451 = scalar_lea.vmem [#allocation2], %s450
        // Predicated region
        $region65: #{tpu_custom_call.1} parent=63 // pred_check
          %p452 = pneg %p55
        $region66: #{tpu_custom_call.1} parent=63 // pred_check_branch
          %454 = sbr.rel (%p452) target = $region68
        $region67: #{tpu_custom_call.1} parent=63 // pred_region
          %455 = dma.done %s448, 128
        $region68: #{tpu_custom_call.1} parent=63 // pred_fallthru
          _
        %s456 = sand.u32 %s34, 1
        %s457 = scalar_lea.sflag [#allocation6], %s456
        %s458 = sand.u32 %s68, 1
        %s459 = smul.addr %s458, 8
        %s460 = scalar_lea.vmem [#allocation5], %s459
        // Predicated region
        $region69: #{tpu_custom_call.1} parent=63 // pred_check
          %p461 = pneg %p81
        $region70: #{tpu_custom_call.1} parent=63 // pred_check_branch
          %463 = sbr.rel (%p461) target = $region72
        $region71: #{tpu_custom_call.1} parent=63 // pred_region
          %464 = dma.done %s457, 128
        $region72: #{tpu_custom_call.1} parent=63 // pred_fallthru
          _
        // Predicated region
        $region73: #{tpu_custom_call.1} parent=63 // pred_check
          %p465 = pneg %p102
        $region74: #{tpu_custom_call.1} parent=63 // pred_check_branch
          %467 = sbr.rel (%p465) target = $region76
        $region75: #{tpu_custom_call.1} parent=63 // pred_region
          %468 = dma.done [#allocation6], 16
        $region76: #{tpu_custom_call.1} parent=63 // pred_fallthru
          _
        // Predicated region
        $region77: #{tpu_custom_call.1} parent=63 // pred_check
          %p469 = pneg %p123
        $region78: #{tpu_custom_call.1} parent=63 // pred_check_branch
          %471 = sbr.rel (%p469) target = $region80
        $region79: #{tpu_custom_call.1} parent=63 // pred_region
          %472 = dma.done [#allocation9], 16
        $region80: #{tpu_custom_call.1} parent=63 // pred_fallthru
          _
        // Predicated region
        $region81: #{tpu_custom_call.1} parent=63 // pred_check
          %p473 = pneg %p144
        $region82: #{tpu_custom_call.1} parent=63 // pred_check_branch
          %475 = sbr.rel (%p473) target = $region84
        $region83: #{tpu_custom_call.1} parent=63 // pred_region
          %476 = dma.done [#allocation9], 16
        $region84: #{tpu_custom_call.1} parent=63 // pred_fallthru
          _
        // Predicated region
        $region85: #{tpu_custom_call.1} parent=63 // pred_check
          %p477 = pneg %p165
        $region86: #{tpu_custom_call.1} parent=63 // pred_check_branch
          %479 = sbr.rel (%p477) target = $region88
        $region87: #{tpu_custom_call.1} parent=63 // pred_region
          %480 = dma.done [#allocation12], 16
        $region88: #{tpu_custom_call.1} parent=63 // pred_fallthru
          _
        // Predicated region
        $region89: #{tpu_custom_call.1} parent=63 // pred_check
          %p481 = pneg %p186
        $region90: #{tpu_custom_call.1} parent=63 // pred_check_branch
          %483 = sbr.rel (%p481) target = $region92
        $region91: #{tpu_custom_call.1} parent=63 // pred_region
          %484 = dma.done [#allocation12], 256
        $region92: #{tpu_custom_call.1} parent=63 // pred_fallthru
          _
        // Predicated region
        $region93: #{tpu_custom_call.1} parent=63 // pred_check
          %p485 = pneg %p207
        $region94: #{tpu_custom_call.1} parent=63 // pred_check_branch
          %487 = sbr.rel (%p485) target = $region96
        $region95: #{tpu_custom_call.1} parent=63 // pred_region
          %488 = dma.done [#allocation15], 256
        $region96: #{tpu_custom_call.1} parent=63 // pred_fallthru
          _
        // Predicated region
        $region97: #{tpu_custom_call.1} parent=63 // pred_check
          %p489 = pneg %p228
        $region98: #{tpu_custom_call.1} parent=63 // pred_check_branch
          %491 = sbr.rel (%p489) target = $region100
        $region99: #{tpu_custom_call.1} parent=63 // pred_region
          %492 = dma.done [#allocation15], 256
        $region100: #{tpu_custom_call.1} parent=63 // pred_fallthru
          _
        %s493 = sand.u32 %s42, 1
        %s494 = scalar_lea.sflag [#allocation3], %s493
        %s495 = sand.u32 %s42, 1
        %s496 = smul.addr %s495, 8
        %s497 = scalar_lea.vmem [#allocation2], %s496
        %p498 = pneg %p55
        %p499 = pneg %p52
        %s500 = sand.u32 %s34, 1
        %s501 = scalar_lea.sflag [#allocation6], %s500
        %s502 = sand.u32 %s68, 1
        %s503 = smul.addr %s502, 8
        %s504 = scalar_lea.vmem [#allocation5], %s503
        %p505 = pneg %p81
        %p506 = pneg %p78
        %p507 = pneg %p102
        %p508 = pneg %p99
        %p509 = pneg %p123
        %p510 = pneg %p120
        %p511 = pneg %p144
        %p512 = pneg %p141
        %p513 = pneg %p165
        %p514 = pneg %p162
        %p515 = pneg %p186
        %p516 = pneg %p183
        %p517 = pneg %p207
        %p518 = pneg %p204
        %p519 = pneg %p228
        %p520 = pneg %p225
        %p521 = pneg %p249
        %p522 = pneg %p246
        %p523 = pneg %p270
        %p524 = pneg %p267
        %p525 = pneg %p296
        %p526 = pneg %p293
        %s527 = sand.u32 %s283, 1
        %s528 = scalar_lea.sflag [#allocation4], %s527
        %s529 = sand.u32 %s283, 1
        %s530 = smul.addr %s529, 8
        %s531 = scalar_lea.vmem [#allocation17], %s530
        %v533 = vld [vmem:[%s451] sm:$0xff]
        %v534 = vld [vmem:[%s460] sm:$0xff]
        %v535 = vld [vmem:[#allocation7] sm:$0x1]
        %v536 = vld [vmem:[#allocation8] sm:$0x1]
        %vm537 = vcmask 261120
        %v538 = vsel %vm537, %v533, 0.0
        %539 = vadd.xlane.f32.xlu0 %v538
        %v540 = vpop.xlane.xlu0 %539
        %v541 = vrcp.pop 32.0
        %v542 = vmul.f32 %v540, %v541
        %v543 = vsub.f32 %v533, %v542
        %v544 = vmul.f32 %v543, %v543
        %v545 = vsel %vm537, %v544, 0.0
        %546 = vadd.xlane.f32.xlu0 %v545
        %v547 = vpop.xlane.xlu0 %546
        %v548 = vmul.f32 %v547, %v541
        %v549 = vadd.f32 %v548, 1e-05
        %v550 = vrsqrt.pop %v549
        %v551 = vmul.f32 %v543, %v550
        %v553 = vlaneseq
        %v554 = vshrl.u32 %v553, 7
        %v555 = vsub.s32 0, %v554
        %v556 = vrot.slane %v535, %v555
        %v558 = vmul.f32 %v551, %v556
        %v560 = vlaneseq
        %v561 = vshrl.u32 %v560, 7
        %v562 = vsub.s32 0, %v561
        %v563 = vrot.slane %v536, %v562
        %v565 = vadd.f32 %v558, %v563
        %v566 = vld [vmem:[#allocation10] sm:$0x1]
        %v567 = vld [vmem:[#allocation11] sm:$0x1]
        %v568 = vsel %vm537, %v534, 0.0
        %569 = vadd.xlane.f32.xlu0 %v568
        %v570 = vpop.xlane.xlu0 %569
        %v571 = vmul.f32 %v570, %v541
        %v572 = vsub.f32 %v534, %v571
        %v573 = vmul.f32 %v572, %v572
        %v574 = vsel %vm537, %v573, 0.0
        %575 = vadd.xlane.f32.xlu0 %v574
        %v576 = vpop.xlane.xlu0 %575
        %v577 = vmul.f32 %v576, %v541
        %v578 = vadd.f32 %v577, 1e-05
        %v579 = vrsqrt.pop %v578
        %v580 = vmul.f32 %v572, %v579
        %v582 = vlaneseq
        %v583 = vshrl.u32 %v582, 7
        %v584 = vsub.s32 0, %v583
        %v585 = vrot.slane %v566, %v584
        %v587 = vmul.f32 %v580, %v585
        %v589 = vlaneseq
        %v590 = vshrl.u32 %v589, 7
        %v591 = vsub.s32 0, %v590
        %v592 = vrot.slane %v567, %v591
        %v594 = vadd.f32 %v587, %v592
        %v595 = vpack.c.bf16 %v565, %v565
        %v596 = vpack.c.bf16 %v594, %v594
        %v597 = vld [vmem:[#allocation13] sm:$0xf]
        %v598 = vld [vmem:[#allocation13 + $0x4] sm:$0xf]
        %v599 = vld [vmem:[#allocation13 + $0x8] sm:$0xf]
        %v600 = vld [vmem:[#allocation13 + $0xc] sm:$0xf]
        %v605 = vunpack.c.l.b16 %v597
        %v606 = vunpack.c.l.b16 %v598
        %v607 = vunpack.c.l.b16 %v599
        %v608 = vunpack.c.l.b16 %v600
        %v609 = vpack.c.b16 %v606, %v605
        %v610 = vpack.c.b16 %v608, %v607
        %v614 = vsel %vm537, %v595, 0
        %616 = vmatprep.subr.bf16.mxu0 0
        %617 = vmatpush1.bf16.msra.mxu0 0
        %618 = vmatprep.subr.bf16.mxu0 0
        %619 = vmatpush1.bf16.msra.mxu0 0
        %620 = vmatprep.subr.bf16.mxu0 0
        %621 = vmatpush1.bf16.msra.mxu0 0
        %622 = vmatprep.subr.bf16.mxu0 0
        %623 = vmatpush1.bf16.msra.mxu0 0
        %624 = vmatprep.subr.bf16.mxu0 0
        %625 = vmatpush1.bf16.msra.mxu0 0
        %626 = vmatprep.subr.bf16.mxu0 0
        %627 = vmatpush1.bf16.msra.mxu0 0
        %628 = vmatprep.subr.bf16.mxu0 0
        %629 = vmatpush1.bf16.msra.mxu0 %v610
        %630 = vmatprep.subr.bf16.mxu0 0
        %631 = vmatpush1.bf16.msra.mxu0 %v609
        %632 = vmatprep.subr.bf16.mxu0 0
        %633 = vmatpush2.bf16.msra.mxu0 0
        %634 = vmatprep.subr.bf16.mxu0 0
        %635 = vmatpush2.bf16.msra.mxu0 0
        %636 = vmatprep.subr.bf16.mxu0 0
        %637 = vmatpush2.bf16.msra.mxu0 0
        %638 = vmatprep.subr.bf16.mxu0 0
        %639 = vmatpush2.bf16.msra.mxu0 0
        %640 = vmatprep.subr.bf16.mxu0 0
        %641 = vmatpush2.bf16.msra.mxu0 0
        %642 = vmatprep.subr.bf16.mxu0 0
        %643 = vmatpush2.bf16.msra.mxu0 0
        %644 = vmatprep.subr.bf16.mxu0 0
        %645 = vmatpush2.bf16.msra.mxu0 0
        %646 = vmatprep.subr.bf16.mxu0 0
        %647 = vmatpush2.bf16.msra.mxu0 0
        %648 = vmatprep.mubr.bf16.mxu0 0
        %649 = vmatmul.mubr.bf16.gmra.mxu0 %v614
        %v650 = vpop.f32.mrf.mxu0
        %v651 = vadd.f32 0.0, %v650
        %v652 = vpop.f32.mrf.mxu0
        %v653 = vpop.f32.mrf.mxu0
        %v654 = vpop.f32.mrf.mxu0
        %655 = vdwg.mxu0
        %v656 = vld [vmem:[#allocation14] sm:$0xf]
        %v657 = vld [vmem:[#allocation14 + $0x4] sm:$0xf]
        %v658 = vld [vmem:[#allocation14 + $0x8] sm:$0xf]
        %v659 = vld [vmem:[#allocation14 + $0xc] sm:$0xf]
        %v664 = vunpack.c.l.b16 %v656
        %v665 = vunpack.c.l.b16 %v657
        %v666 = vunpack.c.l.b16 %v658
        %v667 = vunpack.c.l.b16 %v659
        %v668 = vpack.c.b16 %v665, %v664
        %v669 = vpack.c.b16 %v667, %v666
        %v673 = vsel %vm537, %v596, 0
        %675 = vmatprep.subr.bf16.mxu0 0
        %676 = vmatpush1.bf16.msra.mxu0 0
        %677 = vmatprep.subr.bf16.mxu0 0
        %678 = vmatpush1.bf16.msra.mxu0 0
        %679 = vmatprep.subr.bf16.mxu0 0
        %680 = vmatpush1.bf16.msra.mxu0 0
        %681 = vmatprep.subr.bf16.mxu0 0
        %682 = vmatpush1.bf16.msra.mxu0 0
        %683 = vmatprep.subr.bf16.mxu0 0
        %684 = vmatpush1.bf16.msra.mxu0 0
        %685 = vmatprep.subr.bf16.mxu0 0
        %686 = vmatpush1.bf16.msra.mxu0 0
        %687 = vmatprep.subr.bf16.mxu0 0
        %688 = vmatpush1.bf16.msra.mxu0 %v669
        %689 = vmatprep.subr.bf16.mxu0 0
        %690 = vmatpush1.bf16.msra.mxu0 %v668
        %691 = vmatprep.subr.bf16.mxu0 0
        %692 = vmatpush2.bf16.msra.mxu0 0
        %693 = vmatprep.subr.bf16.mxu0 0
        %694 = vmatpush2.bf16.msra.mxu0 0
        %695 = vmatprep.subr.bf16.mxu0 0
        %696 = vmatpush2.bf16.msra.mxu0 0
        %697 = vmatprep.subr.bf16.mxu0 0
        %698 = vmatpush2.bf16.msra.mxu0 0
        %699 = vmatprep.subr.bf16.mxu0 0
        %700 = vmatpush2.bf16.msra.mxu0 0
        %701 = vmatprep.subr.bf16.mxu0 0
        %702 = vmatpush2.bf16.msra.mxu0 0
        %703 = vmatprep.subr.bf16.mxu0 0
        %704 = vmatpush2.bf16.msra.mxu0 0
        %705 = vmatprep.subr.bf16.mxu0 0
        %706 = vmatpush2.bf16.msra.mxu0 0
        %707 = vmatprep.mubr.bf16.mxu0 0
        %708 = vmatmul.mubr.bf16.gmra.mxu0 %v673
        %v709 = vpop.f32.mrf.mxu0
        %v710 = vadd.f32 0.0, %v709
        %v711 = vpop.f32.mrf.mxu0
        %v712 = vpop.f32.mrf.mxu0
        %v713 = vpop.f32.mrf.mxu0
        %714 = vdwg.mxu0
        %v715 = vld [vmem:[#allocation16] sm:$0xf]
        %v716 = vld [vmem:[#allocation16 + $0x4] sm:$0xf]
        %v717 = vld [vmem:[#allocation16 + $0x8] sm:$0xf]
        %v718 = vld [vmem:[#allocation16 + $0xc] sm:$0xf]
        %v723 = vunpack.c.l.b16 %v715
        %v724 = vunpack.c.l.b16 %v716
        %v725 = vunpack.c.l.b16 %v717
        %v726 = vunpack.c.l.b16 %v718
        %v727 = vpack.c.b16 %v724, %v723
        %v728 = vpack.c.b16 %v726, %v725
        %731 = vmatprep.subr.bf16.mxu0 0
        %732 = vmatpush1.bf16.msra.mxu0 0
        %733 = vmatprep.subr.bf16.mxu0 0
        %734 = vmatpush1.bf16.msra.mxu0 0
        %735 = vmatprep.subr.bf16.mxu0 0
        %736 = vmatpush1.bf16.msra.mxu0 0
        %737 = vmatprep.subr.bf16.mxu0 0
        %738 = vmatpush1.bf16.msra.mxu0 0
        %739 = vmatprep.subr.bf16.mxu0 0
        %740 = vmatpush1.bf16.msra.mxu0 0
        %741 = vmatprep.subr.bf16.mxu0 0
        %742 = vmatpush1.bf16.msra.mxu0 0
        %743 = vmatprep.subr.bf16.mxu0 0
        %744 = vmatpush1.bf16.msra.mxu0 %v728
        %745 = vmatprep.subr.bf16.mxu0 0
        %746 = vmatpush1.bf16.msra.mxu0 %v727
        %747 = vmatprep.subr.bf16.mxu0 0
        %748 = vmatpush2.bf16.msra.mxu0 0
        %749 = vmatprep.subr.bf16.mxu0 0
        %750 = vmatpush2.bf16.msra.mxu0 0
        %751 = vmatprep.subr.bf16.mxu0 0
        %752 = vmatpush2.bf16.msra.mxu0 0
        %753 = vmatprep.subr.bf16.mxu0 0
        %754 = vmatpush2.bf16.msra.mxu0 0
        %755 = vmatprep.subr.bf16.mxu0 0
        %756 = vmatpush2.bf16.msra.mxu0 0
        %757 = vmatprep.subr.bf16.mxu0 0
        %758 = vmatpush2.bf16.msra.mxu0 0
        %759 = vmatprep.subr.bf16.mxu0 0
        %760 = vmatpush2.bf16.msra.mxu0 0
        %761 = vmatprep.subr.bf16.mxu0 0
        %762 = vmatpush2.bf16.msra.mxu0 0
        %763 = vmatprep.mubr.bf16.mxu0 0
        %764 = vmatmul.mubr.bf16.gmra.mxu0 %v673
        %v765 = vpop.f32.mrf.mxu0
        %v766 = vadd.f32 0.0, %v765
        %v767 = vpop.f32.mrf.mxu0
        %v768 = vpop.f32.mrf.mxu0
        %v769 = vpop.f32.mrf.mxu0
        %770 = vdwg.mxu0
        %v771 = vpack.c.bf16 %v651, %v651
        %v772 = vpack.c.bf16 %v710, %v710
        %v773 = vpack.c.bf16 %v766, %v766
        %vm774 = vcmask 130048
        %v776 = vsel %vm774, %v771, 0
        %v779 = vsel %vm774, %v772, 0
        %781 = vmatprep.subr.bf16.mxu0 0
        %782 = vmatpush1.bf16.xpose.msra.mxu0 0
        %783 = vmatprep.subr.bf16.mxu0 0
        %784 = vmatpush1.bf16.xpose.msra.mxu0 0
        %785 = vmatprep.subr.bf16.mxu0 0
        %786 = vmatpush1.bf16.xpose.msra.mxu0 0
        %787 = vmatprep.subr.bf16.mxu0 0
        %788 = vmatpush1.bf16.xpose.msra.mxu0 0
        %789 = vmatprep.subr.bf16.mxu0 0
        %790 = vmatpush1.bf16.xpose.msra.mxu0 0
        %791 = vmatprep.subr.bf16.mxu0 0
        %792 = vmatpush1.bf16.xpose.msra.mxu0 0
        %793 = vmatprep.subr.bf16.mxu0 0
        %794 = vmatpush1.bf16.xpose.msra.mxu0 0
        %795 = vmatprep.subr.bf16.mxu0 0
        %796 = vmatpush1.bf16.xpose.msra.mxu0 %v779
        %797 = vmatprep.subr.bf16.mxu0 0
        %798 = vmatpush2.bf16.xpose.msra.mxu0 0
        %799 = vmatprep.subr.bf16.mxu0 0
        %800 = vmatpush2.bf16.xpose.msra.mxu0 0
        %801 = vmatprep.subr.bf16.mxu0 0
        %802 = vmatpush2.bf16.xpose.msra.mxu0 0
        %803 = vmatprep.subr.bf16.mxu0 0
        %804 = vmatpush2.bf16.xpose.msra.mxu0 0
        %805 = vmatprep.subr.bf16.mxu0 0
        %806 = vmatpush2.bf16.xpose.msra.mxu0 0
        %807 = vmatprep.subr.bf16.mxu0 0
        %808 = vmatpush2.bf16.xpose.msra.mxu0 0
        %809 = vmatprep.subr.bf16.mxu0 0
        %810 = vmatpush2.bf16.xpose.msra.mxu0 0
        %811 = vmatprep.subr.bf16.mxu0 0
        %812 = vmatpush2.bf16.xpose.msra.mxu0 0
        %813 = vmatprep.mubr.bf16.mxu0 0
        %814 = vmatmul.mubr.bf16.gmra.mxu0 %v776
        %v815 = vpop.f32.mrf.mxu0
        %v816 = vadd.f32 0.0, %v815
        %v817 = vpop.f32.mrf.mxu0
        %v818 = vpop.f32.mrf.mxu0
        %v819 = vpop.f32.mrf.mxu0
        %820 = vdwg.mxu0
        %vm821 = vcmask 64512
        %v822 = vsel %vm821, %v816, -inf
        %823 = vmax.xlane.f32.xlu0 %v822
        %v824 = vpop.xlane.xlu0 %823
        %v825 = vsub.f32 %v816, %v824
        %v826 = vmul.f32 %v825, 1.442695
        %v827 = vpow.pop %v826
        %v828 = vsel %vm821, %v827, 0.0
        %829 = vadd.xlane.f32.xlu0 %v828
        %v830 = vpop.xlane.xlu0 %829
        %v831 = vrcp.pop %v830
        %v832 = vmul.f32 %v827, %v831
        %v833 = vpack.c.bf16 %v832, %v832
        %v835 = vsel %vm821, %v833, 0
        %vm837 = vcmask 1043456
        %v839 = vsel %vm837, %v773, 0
        %841 = vmatprep.subr.bf16.mxu0 0
        %842 = vmatpush1.bf16.msra.mxu0 0
        %843 = vmatprep.subr.bf16.mxu0 0
        %844 = vmatpush1.bf16.msra.mxu0 0
        %845 = vmatprep.subr.bf16.mxu0 0
        %846 = vmatpush1.bf16.msra.mxu0 0
        %847 = vmatprep.subr.bf16.mxu0 0
        %848 = vmatpush1.bf16.msra.mxu0 0
        %849 = vmatprep.subr.bf16.mxu0 0
        %850 = vmatpush1.bf16.msra.mxu0 0
        %851 = vmatprep.subr.bf16.mxu0 0
        %852 = vmatpush1.bf16.msra.mxu0 0
        %853 = vmatprep.subr.bf16.mxu0 0
        %854 = vmatpush1.bf16.msra.mxu0 0
        %855 = vmatprep.subr.bf16.mxu0 0
        %856 = vmatpush1.bf16.msra.mxu0 %v839
        %857 = vmatprep.subr.bf16.mxu0 0
        %858 = vmatpush2.bf16.msra.mxu0 0
        %859 = vmatprep.subr.bf16.mxu0 0
        %860 = vmatpush2.bf16.msra.mxu0 0
        %861 = vmatprep.subr.bf16.mxu0 0
        %862 = vmatpush2.bf16.msra.mxu0 0
        %863 = vmatprep.subr.bf16.mxu0 0
        %864 = vmatpush2.bf16.msra.mxu0 0
        %865 = vmatprep.subr.bf16.mxu0 0
        %866 = vmatpush2.bf16.msra.mxu0 0
        %867 = vmatprep.subr.bf16.mxu0 0
        %868 = vmatpush2.bf16.msra.mxu0 0
        %869 = vmatprep.subr.bf16.mxu0 0
        %870 = vmatpush2.bf16.msra.mxu0 0
        %871 = vmatprep.subr.bf16.mxu0 0
        %872 = vmatpush2.bf16.msra.mxu0 0
        %873 = vmatprep.mubr.bf16.mxu0 0
        %874 = vmatmul.mubr.bf16.gmra.mxu0 %v835
        %v875 = vpop.f32.mrf.mxu0
        %v876 = vadd.f32 0.0, %v875
        %v877 = vpop.f32.mrf.mxu0
        %v878 = vpop.f32.mrf.mxu0
        %v879 = vpop.f32.mrf.mxu0
        %880 = vdwg.mxu0
        %v881 = vpack.c.bf16 %v876, %v876
        %v882 = vld [vmem:[%s9] sm:$0xf]
        %v883 = vld [vmem:[%s9 + $0x4] sm:$0xf]
        %885 = vrot.lane.b32.xlu0 %v771, 112
        %v886 = vpop.permute.xlu0 %885
        %888 = vrot.lane.b32.xlu0 %v772, 112
        %v889 = vpop.permute.xlu0 %888
        %v891 = vsel %vm774, %v886, 0
        %v894 = vsel %vm774, %v889, 0
        %896 = vmatprep.subr.bf16.mxu0 0
        %897 = vmatpush1.bf16.xpose.msra.mxu0 0
        %898 = vmatprep.subr.bf16.mxu0 0
        %899 = vmatpush1.bf16.xpose.msra.mxu0 0
        %900 = vmatprep.subr.bf16.mxu0 0
        %901 = vmatpush1.bf16.xpose.msra.mxu0 0
        %902 = vmatprep.subr.bf16.mxu0 0
        %903 = vmatpush1.bf16.xpose.msra.mxu0 0
        %904 = vmatprep.subr.bf16.mxu0 0
        %905 = vmatpush1.bf16.xpose.msra.mxu0 0
        %906 = vmatprep.subr.bf16.mxu0 0
        %907 = vmatpush1.bf16.xpose.msra.mxu0 0
        %908 = vmatprep.subr.bf16.mxu0 0
        %909 = vmatpush1.bf16.xpose.msra.mxu0 0
        %910 = vmatprep.subr.bf16.mxu0 0
        %911 = vmatpush1.bf16.xpose.msra.mxu0 %v894
        %912 = vmatprep.subr.bf16.mxu0 0
        %913 = vmatpush2.bf16.xpose.msra.mxu0 0
        %914 = vmatprep.subr.bf16.mxu0 0
        %915 = vmatpush2.bf16.xpose.msra.mxu0 0
        %916 = vmatprep.subr.bf16.mxu0 0
        %917 = vmatpush2.bf16.xpose.msra.mxu0 0
        %918 = vmatprep.subr.bf16.mxu0 0
        %919 = vmatpush2.bf16.xpose.msra.mxu0 0
        %920 = vmatprep.subr.bf16.mxu0 0
        %921 = vmatpush2.bf16.xpose.msra.mxu0 0
        %922 = vmatprep.subr.bf16.mxu0 0
        %923 = vmatpush2.bf16.xpose.msra.mxu0 0
        %924 = vmatprep.subr.bf16.mxu0 0
        %925 = vmatpush2.bf16.xpose.msra.mxu0 0
        %926 = vmatprep.subr.bf16.mxu0 0
        %927 = vmatpush2.bf16.xpose.msra.mxu0 0
        %928 = vmatprep.mubr.bf16.mxu0 0
        %929 = vmatmul.mubr.bf16.gmra.mxu0 %v891
        %v930 = vpop.f32.mrf.mxu0
        %v931 = vadd.f32 0.0, %v930
        %v932 = vpop.f32.mrf.mxu0
        %v933 = vpop.f32.mrf.mxu0
        %v934 = vpop.f32.mrf.mxu0
        %935 = vdwg.mxu0
        %v936 = vsel %vm821, %v931, -inf
        %937 = vmax.xlane.f32.xlu0 %v936
        %v938 = vpop.xlane.xlu0 %937
        %v939 = vsub.f32 %v931, %v938
        %v940 = vmul.f32 %v939, 1.442695
        %v941 = vpow.pop %v940
        %v942 = vsel %vm821, %v941, 0.0
        %943 = vadd.xlane.f32.xlu0 %v942
        %v944 = vpop.xlane.xlu0 %943
        %v945 = vrcp.pop %v944
        %v946 = vmul.f32 %v941, %v945
        %v947 = vpack.c.bf16 %v946, %v946
        %949 = vrot.lane.b32.xlu0 %v773, 112
        %v950 = vpop.permute.xlu0 %949
        %v952 = vsel %vm821, %v947, 0
        %v955 = vsel %vm837, %v950, 0
        %957 = vmatprep.subr.bf16.mxu0 0
        %958 = vmatpush1.bf16.msra.mxu0 0
        %959 = vmatprep.subr.bf16.mxu0 0
        %960 = vmatpush1.bf16.msra.mxu0 0
        %961 = vmatprep.subr.bf16.mxu0 0
        %962 = vmatpush1.bf16.msra.mxu0 0
        %963 = vmatprep.subr.bf16.mxu0 0
        %964 = vmatpush1.bf16.msra.mxu0 0
        %965 = vmatprep.subr.bf16.mxu0 0
        %966 = vmatpush1.bf16.msra.mxu0 0
        %967 = vmatprep.subr.bf16.mxu0 0
        %968 = vmatpush1.bf16.msra.mxu0 0
        %969 = vmatprep.subr.bf16.mxu0 0
        %970 = vmatpush1.bf16.msra.mxu0 0
        %971 = vmatprep.subr.bf16.mxu0 0
        %972 = vmatpush1.bf16.msra.mxu0 %v955
        %973 = vmatprep.subr.bf16.mxu0 0
        %974 = vmatpush2.bf16.msra.mxu0 0
        %975 = vmatprep.subr.bf16.mxu0 0
        %976 = vmatpush2.bf16.msra.mxu0 0
        %977 = vmatprep.subr.bf16.mxu0 0
        %978 = vmatpush2.bf16.msra.mxu0 0
        %979 = vmatprep.subr.bf16.mxu0 0
        %980 = vmatpush2.bf16.msra.mxu0 0
        %981 = vmatprep.subr.bf16.mxu0 0
        %982 = vmatpush2.bf16.msra.mxu0 0
        %983 = vmatprep.subr.bf16.mxu0 0
        %984 = vmatpush2.bf16.msra.mxu0 0
        %985 = vmatprep.subr.bf16.mxu0 0
        %986 = vmatpush2.bf16.msra.mxu0 0
        %987 = vmatprep.subr.bf16.mxu0 0
        %988 = vmatpush2.bf16.msra.mxu0 0
        %989 = vmatprep.mubr.bf16.mxu0 0
        %990 = vmatmul.mubr.bf16.gmra.mxu0 %v952
        %v991 = vpop.f32.mrf.mxu0
        %v992 = vadd.f32 0.0, %v991
        %v993 = vpop.f32.mrf.mxu0
        %v994 = vpop.f32.mrf.mxu0
        %v995 = vpop.f32.mrf.mxu0
        %996 = vdwg.mxu0
        %v997 = vpack.c.bf16 %v992, %v992
        %v998 = vld [vmem:[%s9 + $0x8] sm:$0xf]
        %v999 = vld [vmem:[%s9 + $0xc] sm:$0xf]
        %v1002 = vunpack.c.l.b16 %v998
        %v1003 = vunpack.c.l.b16 %v999
        %v1004 = vpack.c.b16 %v1003, %v1002
        %v1007 = vsel %vm774, %v997, 0
        %1009 = vmatprep.subr.bf16.mxu0 0
        %1010 = vmatpush1.bf16.msra.mxu0 0
        %1011 = vmatprep.subr.bf16.mxu0 0
        %1012 = vmatpush1.bf16.msra.mxu0 0
        %1013 = vmatprep.subr.bf16.mxu0 0
        %1014 = vmatpush1.bf16.msra.mxu0 0
        %1015 = vmatprep.subr.bf16.mxu0 0
        %1016 = vmatpush1.bf16.msra.mxu0 0
        %1017 = vmatprep.subr.bf16.mxu0 0
        %1018 = vmatpush1.bf16.msra.mxu0 0
        %1019 = vmatprep.subr.bf16.mxu0 0
        %1020 = vmatpush1.bf16.msra.mxu0 0
        %1021 = vmatprep.subr.bf16.mxu0 0
        %1022 = vmatpush1.bf16.msra.mxu0 0
        %1023 = vmatprep.subr.bf16.mxu0 0
        %1024 = vmatpush1.bf16.msra.mxu0 %v1004
        %1025 = vmatprep.subr.bf16.mxu0 0
        %1026 = vmatpush2.bf16.msra.mxu0 0
        %1027 = vmatprep.subr.bf16.mxu0 0
        %1028 = vmatpush2.bf16.msra.mxu0 0
        %1029 = vmatprep.subr.bf16.mxu0 0
        %1030 = vmatpush2.bf16.msra.mxu0 0
        %1031 = vmatprep.subr.bf16.mxu0 0
        %1032 = vmatpush2.bf16.msra.mxu0 0
        %1033 = vmatprep.subr.bf16.mxu0 0
        %1034 = vmatpush2.bf16.msra.mxu0 0
        %1035 = vmatprep.subr.bf16.mxu0 0
        %1036 = vmatpush2.bf16.msra.mxu0 0
        %1037 = vmatprep.subr.bf16.mxu0 0
        %1038 = vmatpush2.bf16.msra.mxu0 0
        %1039 = vmatprep.subr.bf16.mxu0 0
        %1040 = vmatpush2.bf16.msra.mxu0 0
        %1041 = vmatprep.mubr.bf16.mxu0 0
        %1042 = vmatmul.mubr.bf16.gmra.mxu0 %v1007
        %v1043 = vpop.f32.mrf.mxu0
        %v1044 = vadd.f32 0.0, %v1043
        %v1045 = vpop.f32.mrf.mxu0
        %v1046 = vpop.f32.mrf.mxu0
        %v1047 = vpop.f32.mrf.mxu0
        %1048 = vdwg.mxu0
        %v1051 = vunpack.c.l.b16 %v882
        %v1052 = vunpack.c.l.b16 %v883
        %v1053 = vpack.c.b16 %v1052, %v1051
        %v1056 = vsel %vm774, %v881, 0
        %1058 = vmatprep.subr.bf16.mxu0 0
        %1059 = vmatpush1.bf16.msra.mxu0 0
        %1060 = vmatprep.subr.bf16.mxu0 0
        %1061 = vmatpush1.bf16.msra.mxu0 0
        %1062 = vmatprep.subr.bf16.mxu0 0
        %1063 = vmatpush1.bf16.msra.mxu0 0
        %1064 = vmatprep.subr.bf16.mxu0 0
        %1065 = vmatpush1.bf16.msra.mxu0 0
        %1066 = vmatprep.subr.bf16.mxu0 0
        %1067 = vmatpush1.bf16.msra.mxu0 0
        %1068 = vmatprep.subr.bf16.mxu0 0
        %1069 = vmatpush1.bf16.msra.mxu0 0
        %1070 = vmatprep.subr.bf16.mxu0 0
        %1071 = vmatpush1.bf16.msra.mxu0 0
        %1072 = vmatprep.subr.bf16.mxu0 0
        %1073 = vmatpush1.bf16.msra.mxu0 %v1053
        %1074 = vmatprep.subr.bf16.mxu0 0
        %1075 = vmatpush2.bf16.msra.mxu0 0
        %1076 = vmatprep.subr.bf16.mxu0 0
        %1077 = vmatpush2.bf16.msra.mxu0 0
        %1078 = vmatprep.subr.bf16.mxu0 0
        %1079 = vmatpush2.bf16.msra.mxu0 0
        %1080 = vmatprep.subr.bf16.mxu0 0
        %1081 = vmatpush2.bf16.msra.mxu0 0
        %1082 = vmatprep.subr.bf16.mxu0 0
        %1083 = vmatpush2.bf16.msra.mxu0 0
        %1084 = vmatprep.subr.bf16.mxu0 0
        %1085 = vmatpush2.bf16.msra.mxu0 0
        %1086 = vmatprep.subr.bf16.mxu0 0
        %1087 = vmatpush2.bf16.msra.mxu0 0
        %1088 = vmatprep.subr.bf16.mxu0 0
        %1089 = vmatpush2.bf16.msra.mxu0 0
        %1090 = vmatprep.mubr.bf16.mxu0 0
        %1091 = vmatmul.mubr.bf16.gmra.mxu0 %v1056
        %v1092 = vpop.f32.mrf.mxu0
        %v1093 = vadd.f32 %v1044, %v1092
        %v1094 = vpop.f32.mrf.mxu0
        %v1095 = vpop.f32.mrf.mxu0
        %v1096 = vpop.f32.mrf.mxu0
        %1097 = vdwg.mxu0
        %v1098 = vld [vmem:[%s10] sm:$0x1]
        %v1100 = vlaneseq
        %v1101 = vshrl.u32 %v1100, 7
        %v1102 = vsub.s32 0, %v1101
        %v1103 = vrot.slane %v1098, %v1102
        %v1105 = vadd.f32 %v1093, %v1103
        %1106 = vst.msk [vmem:[%s531] sm:$0xff] %vm537, %v1105
        %s1107 = sand.u32 %s283, 1
        %s1108 = scalar_lea.sflag [#allocation4], %s1107
        %s1109 = sand.u32 %s283, 1
        %s1110 = smul.addr %s1109, 8
        %s1111 = scalar_lea.vmem [#allocation17], %s1110
        // Predicated region
        $region101: #{tpu_custom_call.1} parent=63 // pred_check
          %p1112 = pneg %p293
        $region102: #{tpu_custom_call.1} parent=63 // pred_check_branch
          %1114 = sbr.rel (%p1112) target = $region104
        $region103: #{tpu_custom_call.1} parent=63 // pred_region
          %s1116 = ssub.s32 128, 128
          %1117 = vsyncadd %s1108, %s1116
          %s1118 = smul.addr %s34, 128
          %s1119 = scalar_lea.hbm %s11, %s1118
          %s1121 = sshll.u32 %s1111, 4
          %s1122 = int_to_ptr.vmem [resolvable:$true] %s1121
          %1124 = dma.vmem_to_hbm [thread:$0]  %s1122, 128, %s1119, %s1108
        $region104: #{tpu_custom_call.1} parent=63 // pred_fallthru
          _
      $region64: #{tpu_custom_call.1} parent=5 // pred_fallthru
        _
      %p1125 = scmp.le.s32.totalorder 2, %s29
      // Predicated region
      $region105: #{tpu_custom_call.1} parent=5 // pred_check
        %p1126 = pneg %p1125
      $region106: #{tpu_custom_call.1} parent=5 // pred_check_branch
        %1128 = sbr.rel (%p1126) target = $region108
      $region107: #{tpu_custom_call.1} parent=5 // pred_region
        %s1129 = ssub.s32 %s29, 2
        // Predicated region
        $region109: #{tpu_custom_call.1} parent=107 // pred_check
          %p1130 = pneg %p299
        $region110: #{tpu_custom_call.1} parent=107 // pred_check_branch
          %1132 = sbr.rel (%p1130) target = $region112
        $region111: #{tpu_custom_call.1} parent=107 // pred_region
          %s1133 = sand.u32 %s284, 1
          %s1134 = scalar_lea.sflag [#allocation4], %s1133
          %s1135 = sand.u32 %s284, 1
          %s1136 = smul.addr %s1135, 8
          %s1137 = scalar_lea.vmem [#allocation17], %s1136
          %1138 = dma.done %s1134, 128
        $region112: #{tpu_custom_call.1} parent=107 // pred_fallthru
          _
      $region108: #{tpu_custom_call.1} parent=5 // pred_fallthru
        _
    $region6: #{tpu_custom_call.1} parent=1 // loop_footer
      %s33 = sadd.s32 1, %s29
    $region7: #{tpu_custom_call.1} parent=1 // loop_footer_branch
      %28 = sbr.rel target = $region3
    $region8: #{tpu_custom_call.1} parent=1 // loop_exit
      _
    %1139 = vsyncpa [#allocation3], 1
    %s1140 = scalar_lea.sflag [#allocation3], 1
    %1141 = vsyncpa %s1140, 1
    %1142 = vsyncpa [#allocation6], 1
    %s1143 = scalar_lea.sflag [#allocation6], 1
    %1144 = vsyncpa %s1143, 1
    %1145 = vsyncpa [#allocation9], 1
    %1146 = vsyncpa [#allocation12], 1
    %1147 = vsyncpa [#allocation15], 1
    %1148 = vsyncpa [#allocation4], 1
    %s1149 = scalar_lea.sflag [#allocation4], 1
    %1150 = vsyncpa %s1149, 1

// kernel: tpu_custom_call.1
$region0: #{tpu_custom_call.1}
  #allocation0 [shape = 'u32[]', space=smem, size = 0x4, offset = 0x4, fixed_abs, tag = 'smem constant byte address 0x4 - core index']
  #allocation1 [shape = 'u32[144,128]{1,0:T(1,128)}', space=vmem, size = 0x12000, scoped, tag = 'internal scratch']
  %s0 = inlined_call_operand.hbm [shape: f32[16,32], index: 0, kind: input, shape index: {}]
  %s1 = inlined_call_operand.hbm [shape: f32[16,32], index: 1, kind: input, shape index: {}]
  %s2 = inlined_call_operand.hbm [shape: f32[1,32], index: 2, kind: input, shape index: {}]
  %s3 = inlined_call_operand.hbm [shape: f32[1,32], index: 3, kind: input, shape index: {}]
  %s4 = inlined_call_operand.hbm [shape: f32[1,32], index: 4, kind: input, shape index: {}]
  %s5 = inlined_call_operand.hbm [shape: f32[1,32], index: 5, kind: input, shape index: {}]
  %s6 = inlined_call_operand.hbm [shape: bf16[32,32], index: 6, kind: input, shape index: {}]
  %s7 = inlined_call_operand.hbm [shape: bf16[32,32], index: 7, kind: input, shape index: {}]
  %s8 = inlined_call_operand.hbm [shape: bf16[32,32], index: 8, kind: input, shape index: {}]
  %s9 = inlined_call_operand.vmem [shape: bf16[32,32], index: 9, kind: input, shape index: {}]
  %s10 = inlined_call_operand.vmem [shape: f32[1,32], index: 10, kind: input, shape index: {}]
  %s11 = inlined_call_operand.hbm [shape: f32[16,32], index: 11, kind: output, shape index: {}]
  %s12 = sld [smem:[#allocation0]]
  $region113: #{tpu_custom_call.1} parent=0
    _
  %s14 = ssub.s32 1, %s12
  %s15 = scalar_select 0, %s14, %s12
  $region1: #{tpu_custom_call.1} parent=0
    #allocation2 [shape = 'u8[8192]{0}', space=vmem, size = 0x2000, scoped, tag = 'input window, operand 0']
    #allocation3 [shape = 's32[2]{0}', space=sflag, size = 0x8, scoped, tag = 'scoped memory for tpu_custom_call.1']
    #allocation4 [shape = 's32[2]{0}', space=sflag, size = 0x8, scoped, tag = 'scoped memory for tpu_custom_call.1']
    #allocation5 [shape = 'u8[8192]{0}', space=vmem, size = 0x2000, scoped, tag = 'input window, operand 1']
    #allocation6 [shape = 's32[2]{0}', space=sflag, size = 0x8, scoped, tag = 'scoped memory for tpu_custom_call.1']
    #allocation7 [shape = 'u8[512]{0}', space=vmem, size = 0x400, scoped, tag = 'input window, operand 2, single buffered']
    #allocation8 [shape = 'u8[512]{0}', space=vmem, size = 0x400, scoped, tag = 'input window, operand 3, single buffered']
    #allocation9 [shape = 's32[1]{0}', space=sflag, size = 0x4, scoped, tag = 'scoped memory for tpu_custom_call.1']
    #allocation10 [shape = 'u8[512]{0}', space=vmem, size = 0x400, scoped, tag = 'input window, operand 4, single buffered']
    #allocation11 [shape = 'u8[512]{0}', space=vmem, size = 0x400, scoped, tag = 'input window, operand 5, single buffered']
    #allocation12 [shape = 's32[1]{0}', space=sflag, size = 0x4, scoped, tag = 'scoped memory for tpu_custom_call.1']
    #allocation13 [shape = 'u8[8192]{0}', space=vmem, size = 0x2000, scoped, tag = 'input window, operand 6, single buffered']
    #allocation14 [shape = 'u8[8192]{0}', space=vmem, size = 0x2000, scoped, tag = 'input window, operand 7, single buffered']
    #allocation15 [shape = 's32[1]{0}', space=sflag, size = 0x4, scoped, tag = 'scoped memory for tpu_custom_call.1']
    #allocation16 [shape = 'u8[8192]{0}', space=vmem, size = 0x2000, scoped, tag = 'input window, operand 8, single buffered']
    #allocation17 [shape = 'u8[8192]{0}', space=vmem, size = 0x2000, scoped, tag = 'output window, operand 0']
    %16 = vsyncpa [#allocation3], 0
    %s17 = scalar_lea.sflag [#allocation3], 1
    %18 = vsyncpa %s17, 0
    %19 = vsyncpa [#allocation6], 0
    %s20 = scalar_lea.sflag [#allocation6], 1
    %21 = vsyncpa %s20, 0
    %22 = vsyncpa [#allocation9], 0
    %23 = vsyncpa [#allocation12], 0
    %24 = vsyncpa [#allocation15], 0
    %25 = vsyncpa [#allocation4], 0
    %s26 = scalar_lea.sflag [#allocation4], 1
    %27 = vsyncpa %s26, 0
    loop: start=0, step=1, limit=4
    $region2: #{tpu_custom_call.1} parent=1 // loop_pre_header
      _
    $region3: #{tpu_custom_call.1} parent=1 // loop_header
      %s29 = sphi 0, %s33
      %p30 = scmp.ge.s32.totalorder %s29, 4
      %s39 = sphi 0, %s41
      %s42 = sphi 0, %s39
      %s43 = sphi 0, %s42
      %s59 = sphi 0, %s43
      %s65 = sphi 0, %s67
      %s68 = sphi 0, %s65
      %s69 = sphi 0, %s68
      %s85 = sphi 0, %s69
      %s89 = sphi 0, %s89
      %s91 = sphi 0, %s89
      %s92 = sphi 0, %s91
      %s106 = sphi 0, %s92
      %s110 = sphi 0, %s110
      %s112 = sphi 0, %s110
      %s113 = sphi 0, %s112
      %s127 = sphi 0, %s113
      %s131 = sphi 0, %s131
      %s133 = sphi 0, %s131
      %s134 = sphi 0, %s133
      %s148 = sphi 0, %s134
      %s152 = sphi 0, %s152
      %s154 = sphi 0, %s152
      %s155 = sphi 0, %s154
      %s169 = sphi 0, %s155
      %s173 = sphi 0, %s173
      %s175 = sphi 0, %s173
      %s176 = sphi 0, %s175
      %s190 = sphi 0, %s176
      %s194 = sphi 0, %s194
      %s196 = sphi 0, %s194
      %s197 = sphi 0, %s196
      %s211 = sphi 0, %s197
      %s215 = sphi 0, %s215
      %s217 = sphi 0, %s215
      %s218 = sphi 0, %s217
      %s232 = sphi 0, %s218
      %s236 = sphi 0, %s236
      %s238 = sphi 0, %s236
      %s239 = sphi 0, %s238
      %s253 = sphi 0, %s239
      %s257 = sphi 0, %s257
      %s259 = sphi 0, %s257
      %s260 = sphi 0, %s259
      %s274 = sphi 0, %s260
      %s280 = sphi 0, %s282
      %s283 = sphi 0, %s280
      %s284 = sphi 0, %s283
      %s300 = sphi 0, %s284
    $region4: #{tpu_custom_call.1} parent=1 // loop_header_branch
      %32 = sbr.rel (%p30) target = $region8
    $region5: #{tpu_custom_call.1} parent=1 // loop_body
      %s34 = ssub.s32 %s29, 1
      %s35 = ssub.s32 %s29, 2
      %s36 = sadd.s32 %s29, 1
      %s37 = ssub.s32 %s29, %s36
      %p38 = scmp.eq.s32.totalorder %s37, 0
      %s40 = sadd.s32 %s39, 1
      %s41 = scalar_select %p38, %s39, %s40
      %p44 = pneg %p38
      %p45 = scmp.eq.s32.totalorder %s29, 1
      %p46 = por %p44, %p45
      %p47 = scmp.ne.s32.totalorder %s39, %s42
      %p48 = scmp.eq.s32.totalorder %s29, 0
      %p49 = por %p47, %p48
      %p50 = scmp.ne.s32.totalorder %s39, %s42
      %p51 = scmp.eq.s32.totalorder %s34, 1
      %p52 = por %p50, %p51
      %p53 = scmp.ne.s32.totalorder %s42, %s43
      %p54 = scmp.eq.s32.totalorder %s34, 0
      %p55 = por %p53, %p54
      %p56 = scmp.ne.s32.totalorder %s42, %s43
      %p57 = scmp.eq.s32.totalorder %s35, 1
      %p58 = por %p56, %p57
      %p60 = scmp.ne.s32.totalorder %s43, %s59
      %p61 = scmp.eq.s32.totalorder %s35, 0
      %p62 = por %p60, %p61
      %s63 = ssub.s32 %s29, %s36
      %p64 = scmp.eq.s32.totalorder %s63, 0
      %s66 = sadd.s32 %s65, 1
      %s67 = scalar_select %p64, %s65, %s66
      %p70 = pneg %p64
      %p71 = scmp.eq.s32.totalorder %s29, 1
      %p72 = por %p70, %p71
      %p73 = scmp.ne.s32.totalorder %s65, %s68
      %p74 = scmp.eq.s32.totalorder %s29, 0
      %p75 = por %p73, %p74
      %p76 = scmp.ne.s32.totalorder %s65, %s68
      %p77 = scmp.eq.s32.totalorder %s34, 1
      %p78 = por %p76, %p77
      %p79 = scmp.ne.s32.totalorder %s68, %s69
      %p80 = scmp.eq.s32.totalorder %s34, 0
      %p81 = por %p79, %p80
      %p82 = scmp.ne.s32.totalorder %s68, %s69
      %p83 = scmp.eq.s32.totalorder %s35, 1
      %p84 = por %p82, %p83
      %p86 = scmp.ne.s32.totalorder %s69, %s85
      %p87 = scmp.eq.s32.totalorder %s35, 0
      %p88 = por %p86, %p87
      %s90 = sadd.s32 %s89, 1
      %p93 = scmp.eq.s32.totalorder %s29, 1
      %p94 = scmp.ne.s32.totalorder %s89, %s91
      %p95 = scmp.eq.s32.totalorder %s29, 0
      %p96 = por %p94, %p95
      %p97 = scmp.ne.s32.totalorder %s89, %s91
      %p98 = scmp.eq.s32.totalorder %s34, 1
      %p99 = por %p97, %p98
      %p100 = scmp.ne.s32.totalorder %s91, %s92
      %p101 = scmp.eq.s32.totalorder %s34, 0
      %p102 = por %p100, %p101
      %p103 = scmp.ne.s32.totalorder %s91, %s92
      %p104 = scmp.eq.s32.totalorder %s35, 1
      %p105 = por %p103, %p104
      %p107 = scmp.ne.s32.totalorder %s92, %s106
      %p108 = scmp.eq.s32.totalorder %s35, 0
      %p109 = por %p107, %p108
      %s111 = sadd.s32 %s110, 1
      %p114 = scmp.eq.s32.totalorder %s29, 1
      %p115 = scmp.ne.s32.totalorder %s110, %s112
      %p116 = scmp.eq.s32.totalorder %s29, 0
      %p117 = por %p115, %p116
      %p118 = scmp.ne.s32.totalorder %s110, %s112
      %p119 = scmp.eq.s32.totalorder %s34, 1
      %p120 = por %p118, %p119
      %p121 = scmp.ne.s32.totalorder %s112, %s113
      %p122 = scmp.eq.s32.totalorder %s34, 0
      %p123 = por %p121, %p122
      %p124 = scmp.ne.s32.totalorder %s112, %s113
      %p125 = scmp.eq.s32.totalorder %s35, 1
      %p126 = por %p124, %p125
      %p128 = scmp.ne.s32.totalorder %s113, %s127
      %p129 = scmp.eq.s32.totalorder %s35, 0
      %p130 = por %p128, %p129
      %s132 = sadd.s32 %s131, 1
      %p135 = scmp.eq.s32.totalorder %s29, 1
      %p136 = scmp.ne.s32.totalorder %s131, %s133
      %p137 = scmp.eq.s32.totalorder %s29, 0
      %p138 = por %p136, %p137
      %p139 = scmp.ne.s32.totalorder %s131, %s133
      %p140 = scmp.eq.s32.totalorder %s34, 1
      %p141 = por %p139, %p140
      %p142 = scmp.ne.s32.totalorder %s133, %s134
      %p143 = scmp.eq.s32.totalorder %s34, 0
      %p144 = por %p142, %p143
      %p145 = scmp.ne.s32.totalorder %s133, %s134
      %p146 = scmp.eq.s32.totalorder %s35, 1
      %p147 = por %p145, %p146
      %p149 = scmp.ne.s32.totalorder %s134, %s148
      %p150 = scmp.eq.s32.totalorder %s35, 0
      %p151 = por %p149, %p150
      %s153 = sadd.s32 %s152, 1
      %p156 = scmp.eq.s32.totalorder %s29, 1
      %p157 = scmp.ne.s32.totalorder %s152, %s154
      %p158 = scmp.eq.s32.totalorder %s29, 0
      %p159 = por %p157, %p158
      %p160 = scmp.ne.s32.totalorder %s152, %s154
      %p161 = scmp.eq.s32.totalorder %s34, 1
      %p162 = por %p160, %p161
      %p163 = scmp.ne.s32.totalorder %s154, %s155
      %p164 = scmp.eq.s32.totalorder %s34, 0
      %p165 = por %p163, %p164
      %p166 = scmp.ne.s32.totalorder %s154, %s155
      %p167 = scmp.eq.s32.totalorder %s35, 1
      %p168 = por %p166, %p167
      %p170 = scmp.ne.s32.totalorder %s155, %s169
      %p171 = scmp.eq.s32.totalorder %s35, 0
      %p172 = por %p170, %p171
      %s174 = sadd.s32 %s173, 1
      %p177 = scmp.eq.s32.totalorder %s29, 1
      %p178 = scmp.ne.s32.totalorder %s173, %s175
      %p179 = scmp.eq.s32.totalorder %s29, 0
      %p180 = por %p178, %p179
      %p181 = scmp.ne.s32.totalorder %s173, %s175
      %p182 = scmp.eq.s32.totalorder %s34, 1
      %p183 = por %p181, %p182
      %p184 = scmp.ne.s32.totalorder %s175, %s176
      %p185 = scmp.eq.s32.totalorder %s34, 0
      %p186 = por %p184, %p185
      %p187 = scmp.ne.s32.totalorder %s175, %s176
      %p188 = scmp.eq.s32.totalorder %s35, 1
      %p189 = por %p187, %p188
      %p191 = scmp.ne.s32.totalorder %s176, %s190
      %p192 = scmp.eq.s32.totalorder %s35, 0
      %p193 = por %p191, %p192
      %s195 = sadd.s32 %s194, 1
      %p198 = scmp.eq.s32.totalorder %s29, 1
      %p199 = scmp.ne.s32.totalorder %s194, %s196
      %p200 = scmp.eq.s32.totalorder %s29, 0
      %p201 = por %p199, %p200
      %p202 = scmp.ne.s32.totalorder %s194, %s196
      %p203 = scmp.eq.s32.totalorder %s34, 1
      %p204 = por %p202, %p203
      %p205 = scmp.ne.s32.totalorder %s196, %s197
      %p206 = scmp.eq.s32.totalorder %s34, 0
      %p207 = por %p205, %p206
      %p208 = scmp.ne.s32.totalorder %s196, %s197
      %p209 = scmp.eq.s32.totalorder %s35, 1
      %p210 = por %p208, %p209
      %p212 = scmp.ne.s32.totalorder %s197, %s211
      %p213 = scmp.eq.s32.totalorder %s35, 0
      %p214 = por %p212, %p213
      %s216 = sadd.s32 %s215, 1
      %p219 = scmp.eq.s32.totalorder %s29, 1
      %p220 = scmp.ne.s32.totalorder %s215, %s217
      %p221 = scmp.eq.s32.totalorder %s29, 0
      %p222 = por %p220, %p221
      %p223 = scmp.ne.s32.totalorder %s215, %s217
      %p224 = scmp.eq.s32.totalorder %s34, 1
      %p225 = por %p223, %p224
      %p226 = scmp.ne.s32.totalorder %s217, %s218
      %p227 = scmp.eq.s32.totalorder %s34, 0
      %p228 = por %p226, %p227
      %p229 = scmp.ne.s32.totalorder %s217, %s218
      %p230 = scmp.eq.s32.totalorder %s35, 1
      %p231 = por %p229, %p230
      %p233 = scmp.ne.s32.totalorder %s218, %s232
      %p234 = scmp.eq.s32.totalorder %s35, 0
      %p235 = por %p233, %p234
      %s237 = sadd.s32 %s236, 1
      %p240 = scmp.eq.s32.totalorder %s29, 1
      %p241 = scmp.ne.s32.totalorder %s236, %s238
      %p242 = scmp.eq.s32.totalorder %s29, 0
      %p243 = por %p241, %p242
      %p244 = scmp.ne.s32.totalorder %s236, %s238
      %p245 = scmp.eq.s32.totalorder %s34, 1
      %p246 = por %p244, %p245
      %p247 = scmp.ne.s32.totalorder %s238, %s239
      %p248 = scmp.eq.s32.totalorder %s34, 0
      %p249 = por %p247, %p248
      %p250 = scmp.ne.s32.totalorder %s238, %s239
      %p251 = scmp.eq.s32.totalorder %s35, 1
      %p252 = por %p250, %p251
      %p254 = scmp.ne.s32.totalorder %s239, %s253
      %p255 = scmp.eq.s32.totalorder %s35, 0
      %p256 = por %p254, %p255
      %s258 = sadd.s32 %s257, 1
      %p261 = scmp.eq.s32.totalorder %s29, 1
      %p262 = scmp.ne.s32.totalorder %s257, %s259
      %p263 = scmp.eq.s32.totalorder %s29, 0
      %p264 = por %p262, %p263
      %p265 = scmp.ne.s32.totalorder %s257, %s259
      %p266 = scmp.eq.s32.totalorder %s34, 1
      %p267 = por %p265, %p266
      %p268 = scmp.ne.s32.totalorder %s259, %s260
      %p269 = scmp.eq.s32.totalorder %s34, 0
      %p270 = por %p268, %p269
      %p271 = scmp.ne.s32.totalorder %s259, %s260
      %p272 = scmp.eq.s32.totalorder %s35, 1
      %p273 = por %p271, %p272
      %p275 = scmp.ne.s32.totalorder %s260, %s274
      %p276 = scmp.eq.s32.totalorder %s35, 0
      %p277 = por %p275, %p276
      %s278 = ssub.s32 %s29, %s36
      %p279 = scmp.eq.s32.totalorder %s278, 0
      %s281 = sadd.s32 %s280, 1
      %s282 = scalar_select %p279, %s280, %s281
      %p285 = pneg %p279
      %p286 = scmp.eq.s32.totalorder %s29, 1
      %p287 = por %p285, %p286
      %p288 = scmp.ne.s32.totalorder %s280, %s283
      %p289 = scmp.eq.s32.totalorder %s29, 0
      %p290 = por %p288, %p289
      %p291 = scmp.ne.s32.totalorder %s280, %s283
      %p292 = scmp.eq.s32.totalorder %s34, 1
      %p293 = por %p291, %p292
      %p294 = scmp.ne.s32.totalorder %s283, %s284
      %p295 = scmp.eq.s32.totalorder %s34, 0
      %p296 = por %p294, %p295
      %p297 = scmp.ne.s32.totalorder %s283, %s284
      %p298 = scmp.eq.s32.totalorder %s35, 1
      %p299 = por %p297, %p298
      %p301 = scmp.ne.s32.totalorder %s284, %s300
      %p302 = scmp.eq.s32.totalorder %s35, 0
      %p303 = por %p301, %p302
      %p304 = scmp.le.s32.totalorder 1, %s29
      %p305 = scmp.lt.s32.totalorder %s29, 3
      %p306 = pnand %p304, %p305
      %p307 = pneg %p306
      // Predicated region
      $region9: #{tpu_custom_call.1} parent=5 // pred_check
        _
      $region10: #{tpu_custom_call.1} parent=5 // pred_check_branch
        %309 = sbr.rel (%p306) target = $region12
      $region11: #{tpu_custom_call.1} parent=5 // pred_region
        %s310 = ssub.s32 %s29, 1
        // Predicated region
        $region13: #{tpu_custom_call.1} parent=11 // pred_check
          %p311 = pneg %p102
        $region14: #{tpu_custom_call.1} parent=11 // pred_check_branch
          %313 = sbr.rel (%p311) target = $region16
        $region15: #{tpu_custom_call.1} parent=11 // pred_region
          %s315 = ssub.s32 16, 16
          %316 = vsyncadd [#allocation6], %s315
          %s318 = sshll.u32 [#allocation7], 4
          %s319 = int_to_ptr.vmem [resolvable:$true] %s318
          %321 = dma.hbm_to_vmem [thread:$0]  %s2, 16, %s319, [#allocation6]
        $region16: #{tpu_custom_call.1} parent=11 // pred_fallthru
          _
        // Predicated region
        $region17: #{tpu_custom_call.1} parent=11 // pred_check
          %p322 = pneg %p123
        $region18: #{tpu_custom_call.1} parent=11 // pred_check_branch
          %324 = sbr.rel (%p322) target = $region20
        $region19: #{tpu_custom_call.1} parent=11 // pred_region
          %s326 = ssub.s32 16, 16
          %327 = vsyncadd [#allocation9], %s326
          %s329 = sshll.u32 [#allocation8], 4
          %s330 = int_to_ptr.vmem [resolvable:$true] %s329
          %332 = dma.hbm_to_vmem [thread:$0]  %s3, 16, %s330, [#allocation9]
        $region20: #{tpu_custom_call.1} parent=11 // pred_fallthru
          _
        // Predicated region
        $region21: #{tpu_custom_call.1} parent=11 // pred_check
          %p333 = pneg %p144
        $region22: #{tpu_custom_call.1} parent=11 // pred_check_branch
          %335 = sbr.rel (%p333) target = $region24
        $region23: #{tpu_custom_call.1} parent=11 // pred_region
          %s337 = ssub.s32 16, 16
          %338 = vsyncadd [#allocation9], %s337
          %s340 = sshll.u32 [#allocation10], 4
          %s341 = int_to_ptr.vmem [resolvable:$true] %s340
          %343 = dma.hbm_to_vmem [thread:$0]  %s4, 16, %s341, [#allocation9]
        $region24: #{tpu_custom_call.1} parent=11 // pred_fallthru
          _
        // Predicated region
        $region25: #{tpu_custom_call.1} parent=11 // pred_check
          %p344 = pneg %p165
        $region26: #{tpu_custom_call.1} parent=11 // pred_check_branch
          %346 = sbr.rel (%p344) target = $region28
        $region27: #{tpu_custom_call.1} parent=11 // pred_region
          %s348 = ssub.s32 16, 16
          %349 = vsyncadd [#allocation12], %s348
          %s351 = sshll.u32 [#allocation11], 4
          %s352 = int_to_ptr.vmem [resolvable:$true] %s351
          %354 = dma.hbm_to_vmem [thread:$0]  %s5, 16, %s352, [#allocation12]
        $region28: #{tpu_custom_call.1} parent=11 // pred_fallthru
          _
        // Predicated region
        $region29: #{tpu_custom_call.1} parent=11 // pred_check
          %p355 = pneg %p186
        $region30: #{tpu_custom_call.1} parent=11 // pred_check_branch
          %357 = sbr.rel (%p355) target = $region32
        $region31: #{tpu_custom_call.1} parent=11 // pred_region
          %s359 = ssub.s32 256, 256
          %360 = vsyncadd [#allocation12], %s359
          %s361 = sshll.u32 [#allocation13], 4
          %s362 = int_to_ptr.vmem [resolvable:$true] %s361
          %367 = dma.hbm_to_vmem [thread:$0]  %s6, 256, %s362, [#allocation12], 64, 64, 4
        $region32: #{tpu_custom_call.1} parent=11 // pred_fallthru
          _
        // Predicated region
        $region33: #{tpu_custom_call.1} parent=11 // pred_check
          %p368 = pneg %p207
        $region34: #{tpu_custom_call.1} parent=11 // pred_check_branch
          %370 = sbr.rel (%p368) target = $region36
        $region35: #{tpu_custom_call.1} parent=11 // pred_region
          %s372 = ssub.s32 256, 256
          %373 = vsyncadd [#allocation15], %s372
          %s374 = sshll.u32 [#allocation14], 4
          %s375 = int_to_ptr.vmem [resolvable:$true] %s374
          %380 = dma.hbm_to_vmem [thread:$0]  %s7, 256, %s375, [#allocation15], 64, 64, 4
        $region36: #{tpu_custom_call.1} parent=11 // pred_fallthru
          _
        // Predicated region
        $region37: #{tpu_custom_call.1} parent=11 // pred_check
          %p381 = pneg %p228
        $region38: #{tpu_custom_call.1} parent=11 // pred_check_branch
          %383 = sbr.rel (%p381) target = $region40
        $region39: #{tpu_custom_call.1} parent=11 // pred_region
          %s385 = ssub.s32 256, 256
          %386 = vsyncadd [#allocation15], %s385
          %s387 = sshll.u32 [#allocation16], 4
          %s388 = int_to_ptr.vmem [resolvable:$true] %s387
          %393 = dma.hbm_to_vmem [thread:$0]  %s8, 256, %s388, [#allocation15], 64, 64, 4
        $region40: #{tpu_custom_call.1} parent=11 // pred_fallthru
          _
        // Predicated region
        $region41: #{tpu_custom_call.1} parent=11 // pred_check
          %p394 = pneg %p249
        $region42: #{tpu_custom_call.1} parent=11 // pred_check_branch
          %396 = sbr.rel (%p394) target = $region44
        $region43: #{tpu_custom_call.1} parent=11 // pred_region
          _
        $region44: #{tpu_custom_call.1} parent=11 // pred_fallthru
          _
        // Predicated region
        $region45: #{tpu_custom_call.1} parent=11 // pred_check
          %p397 = pneg %p270
        $region46: #{tpu_custom_call.1} parent=11 // pred_check_branch
          %399 = sbr.rel (%p397) target = $region48
        $region47: #{tpu_custom_call.1} parent=11 // pred_region
          _
        $region48: #{tpu_custom_call.1} parent=11 // pred_fallthru
          _
      $region12: #{tpu_custom_call.1} parent=5 // pred_fallthru
        _
      %p400 = scmp.lt.s32.totalorder %s29, 2
      // Predicated region
      $region49: #{tpu_custom_call.1} parent=5 // pred_check
        %p401 = pneg %p400
      $region50: #{tpu_custom_call.1} parent=5 // pred_check_branch
        %403 = sbr.rel (%p401) target = $region52
      $region51: #{tpu_custom_call.1} parent=5 // pred_region
        // Predicated region
        $region53: #{tpu_custom_call.1} parent=51 // pred_check
          %p404 = pneg %p49
        $region54: #{tpu_custom_call.1} parent=51 // pred_check_branch
          %406 = sbr.rel (%p404) target = $region56
        $region55: #{tpu_custom_call.1} parent=51 // pred_region
          %s407 = sand.u32 %s39, 1
          %s408 = scalar_lea.sflag [#allocation3], %s407
          %s409 = sand.u32 %s39, 1
          %s410 = smul.addr %s409, 8
          %s411 = scalar_lea.vmem [#allocation2], %s410
          %s413 = ssub.s32 128, 128
          %414 = vsyncadd %s408, %s413
          %s415 = smul.addr %s29, 128
          %s416 = scalar_lea.hbm %s0, %s415
          %s418 = sshll.u32 %s411, 4
          %s419 = int_to_ptr.vmem [resolvable:$true] %s418
          %421 = dma.hbm_to_vmem [thread:$0]  %s416, 128, %s419, %s408
        $region56: #{tpu_custom_call.1} parent=51 // pred_fallthru
          _
        // Predicated region
        $region57: #{tpu_custom_call.1} parent=51 // pred_check
          %p422 = pneg %p75
        $region58: #{tpu_custom_call.1} parent=51 // pred_check_branch
          %424 = sbr.rel (%p422) target = $region60
        $region59: #{tpu_custom_call.1} parent=51 // pred_region
          %s425 = sand.u32 %s29, 1
          %s426 = scalar_lea.sflag [#allocation6], %s425
          %s427 = sand.u32 %s65, 1
          %s428 = smul.addr %s427, 8
          %s429 = scalar_lea.vmem [#allocation5], %s428
          %s431 = ssub.s32 128, 128
          %432 = vsyncadd %s426, %s431
          %s433 = smul.addr %s29, 128
          %s434 = scalar_lea.hbm %s1, %s433
          %s436 = sshll.u32 %s429, 4
          %s437 = int_to_ptr.vmem [resolvable:$true] %s436
          %439 = dma.hbm_to_vmem [thread:$0]  %s434, 128, %s437, %s426
        $region60: #{tpu_custom_call.1} parent=51 // pred_fallthru
          _
      $region52: #{tpu_custom_call.1} parent=5 // pred_fallthru
        _
      %p440 = scmp.le.s32.totalorder 1, %s29
      %p441 = scmp.lt.s32.totalorder %s29, 3
      %p442 = pnand %p440, %p441
      %p443 = pneg %p442
      // Predicated region
      $region61: #{tpu_custom_call.1} parent=5 // pred_check
        _
      $region62: #{tpu_custom_call.1} parent=5 // pred_check_branch
        %445 = sbr.rel (%p442) target = $region64
      $region63: #{tpu_custom_call.1} parent=5 // pred_region
        %s446 = ssub.s32 %s29, 1
        %s447 = sand.u32 %s42, 1
        %s448 = scalar_lea.sflag [#allocation3], %s447
        %s449 = sand.u32 %s42, 1
        %s450 = smul.addr %s449, 8
        %s451 = scalar_lea.vmem [#allocation2], %s450
        // Predicated region
        $region65: #{tpu_custom_call.1} parent=63 // pred_check
          %p452 = pneg %p55
        $region66: #{tpu_custom_call.1} parent=63 // pred_check_branch
          %454 = sbr.rel (%p452) target = $region68
        $region67: #{tpu_custom_call.1} parent=63 // pred_region
          %455 = dma.done %s448, 128
        $region68: #{tpu_custom_call.1} parent=63 // pred_fallthru
          _
        %s456 = sand.u32 %s34, 1
        %s457 = scalar_lea.sflag [#allocation6], %s456
        %s458 = sand.u32 %s68, 1
        %s459 = smul.addr %s458, 8
        %s460 = scalar_lea.vmem [#allocation5], %s459
        // Predicated region
        $region69: #{tpu_custom_call.1} parent=63 // pred_check
          %p461 = pneg %p81
        $region70: #{tpu_custom_call.1} parent=63 // pred_check_branch
          %463 = sbr.rel (%p461) target = $region72
        $region71: #{tpu_custom_call.1} parent=63 // pred_region
          %464 = dma.done %s457, 128
        $region72: #{tpu_custom_call.1} parent=63 // pred_fallthru
          _
        // Predicated region
        $region73: #{tpu_custom_call.1} parent=63 // pred_check
          %p465 = pneg %p102
        $region74: #{tpu_custom_call.1} parent=63 // pred_check_branch
          %467 = sbr.rel (%p465) target = $region76
        $region75: #{tpu_custom_call.1} parent=63 // pred_region
          %468 = dma.done [#allocation6], 16
        $region76: #{tpu_custom_call.1} parent=63 // pred_fallthru
          _
        // Predicated region
        $region77: #{tpu_custom_call.1} parent=63 // pred_check
          %p469 = pneg %p123
        $region78: #{tpu_custom_call.1} parent=63 // pred_check_branch
          %471 = sbr.rel (%p469) target = $region80
        $region79: #{tpu_custom_call.1} parent=63 // pred_region
          %472 = dma.done [#allocation9], 16
        $region80: #{tpu_custom_call.1} parent=63 // pred_fallthru
          _
        // Predicated region
        $region81: #{tpu_custom_call.1} parent=63 // pred_check
          %p473 = pneg %p144
        $region82: #{tpu_custom_call.1} parent=63 // pred_check_branch
          %475 = sbr.rel (%p473) target = $region84
        $region83: #{tpu_custom_call.1} parent=63 // pred_region
          %476 = dma.done [#allocation9], 16
        $region84: #{tpu_custom_call.1} parent=63 // pred_fallthru
          _
        // Predicated region
        $region85: #{tpu_custom_call.1} parent=63 // pred_check
          %p477 = pneg %p165
        $region86: #{tpu_custom_call.1} parent=63 // pred_check_branch
          %479 = sbr.rel (%p477) target = $region88
        $region87: #{tpu_custom_call.1} parent=63 // pred_region
          %480 = dma.done [#allocation12], 16
        $region88: #{tpu_custom_call.1} parent=63 // pred_fallthru
          _
        // Predicated region
        $region89: #{tpu_custom_call.1} parent=63 // pred_check
          %p481 = pneg %p186
        $region90: #{tpu_custom_call.1} parent=63 // pred_check_branch
          %483 = sbr.rel (%p481) target = $region92
        $region91: #{tpu_custom_call.1} parent=63 // pred_region
          %484 = dma.done [#allocation12], 256
        $region92: #{tpu_custom_call.1} parent=63 // pred_fallthru
          _
        // Predicated region
        $region93: #{tpu_custom_call.1} parent=63 // pred_check
          %p485 = pneg %p207
        $region94: #{tpu_custom_call.1} parent=63 // pred_check_branch
          %487 = sbr.rel (%p485) target = $region96
        $region95: #{tpu_custom_call.1} parent=63 // pred_region
          %488 = dma.done [#allocation15], 256
        $region96: #{tpu_custom_call.1} parent=63 // pred_fallthru
          _
        // Predicated region
        $region97: #{tpu_custom_call.1} parent=63 // pred_check
          %p489 = pneg %p228
        $region98: #{tpu_custom_call.1} parent=63 // pred_check_branch
          %491 = sbr.rel (%p489) target = $region100
        $region99: #{tpu_custom_call.1} parent=63 // pred_region
          %492 = dma.done [#allocation15], 256
        $region100: #{tpu_custom_call.1} parent=63 // pred_fallthru
          _
        %s493 = sand.u32 %s42, 1
        %s494 = scalar_lea.sflag [#allocation3], %s493
        %s495 = sand.u32 %s42, 1
        %s496 = smul.addr %s495, 8
        %s497 = scalar_lea.vmem [#allocation2], %s496
        %p498 = pneg %p55
        %p499 = pneg %p52
        %s500 = sand.u32 %s34, 1
        %s501 = scalar_lea.sflag [#allocation6], %s500
        %s502 = sand.u32 %s68, 1
        %s503 = smul.addr %s502, 8
        %s504 = scalar_lea.vmem [#allocation5], %s503
        %p505 = pneg %p81
        %p506 = pneg %p78
        %p507 = pneg %p102
        %p508 = pneg %p99
        %p509 = pneg %p123
        %p510 = pneg %p120
        %p511 = pneg %p144
        %p512 = pneg %p141
        %p513 = pneg %p165
        %p514 = pneg %p162
        %p515 = pneg %p186
        %p516 = pneg %p183
        %p517 = pneg %p207
        %p518 = pneg %p204
        %p519 = pneg %p228
        %p520 = pneg %p225
        %p521 = pneg %p249
        %p522 = pneg %p246
        %p523 = pneg %p270
        %p524 = pneg %p267
        %p525 = pneg %p296
        %p526 = pneg %p293
        %s527 = sand.u32 %s283, 1
        %s528 = scalar_lea.sflag [#allocation4], %s527
        %s529 = sand.u32 %s283, 1
        %s530 = smul.addr %s529, 8
        %s531 = scalar_lea.vmem [#allocation17], %s530
        %v533 = vld [vmem:[%s451] sm:$0xff]
        %v534 = vld [vmem:[%s460] sm:$0xff]
        %v535 = vld [vmem:[#allocation7] sm:$0x1]
        %v536 = vld [vmem:[#allocation8] sm:$0x1]
        %vm537 = vcmask 261120
        %v538 = vsel %vm537, %v533, 0.0
        %539 = vadd.xlane.f32.xlu0 %v538
        %v540 = vpop.xlane.xlu0 %539
        %v541 = vrcp.pop 32.0
        %v542 = vmul.f32 %v540, %v541
        %v543 = vsub.f32 %v533, %v542
        %v544 = vmul.f32 %v543, %v543
        %v545 = vsel %vm537, %v544, 0.0
        %546 = vadd.xlane.f32.xlu0 %v545
        %v547 = vpop.xlane.xlu0 %546
        %v548 = vmul.f32 %v547, %v541
        %v549 = vadd.f32 %v548, 1e-05
        %v550 = vrsqrt.pop %v549
        %v551 = vmul.f32 %v543, %v550
        %v553 = vlaneseq
        %v554 = vshrl.u32 %v553, 7
        %v555 = vsub.s32 0, %v554
        %v556 = vrot.slane %v535, %v555
        %v558 = vmul.f32 %v551, %v556
        %v560 = vlaneseq
        %v561 = vshrl.u32 %v560, 7
        %v562 = vsub.s32 0, %v561
        %v563 = vrot.slane %v536, %v562
        %v565 = vadd.f32 %v558, %v563
        %v566 = vld [vmem:[#allocation10] sm:$0x1]
        %v567 = vld [vmem:[#allocation11] sm:$0x1]
        %v568 = vsel %vm537, %v534, 0.0
        %569 = vadd.xlane.f32.xlu0 %v568
        %v570 = vpop.xlane.xlu0 %569
        %v571 = vmul.f32 %v570, %v541
        %v572 = vsub.f32 %v534, %v571
        %v573 = vmul.f32 %v572, %v572
        %v574 = vsel %vm537, %v573, 0.0
        %575 = vadd.xlane.f32.xlu0 %v574
        %v576 = vpop.xlane.xlu0 %575
        %v577 = vmul.f32 %v576, %v541
        %v578 = vadd.f32 %v577, 1e-05
        %v579 = vrsqrt.pop %v578
        %v580 = vmul.f32 %v572, %v579
        %v582 = vlaneseq
        %v583 = vshrl.u32 %v582, 7
        %v584 = vsub.s32 0, %v583
        %v585 = vrot.slane %v566, %v584
        %v587 = vmul.f32 %v580, %v585
        %v589 = vlaneseq
        %v590 = vshrl.u32 %v589, 7
        %v591 = vsub.s32 0, %v590
        %v592 = vrot.slane %v567, %v591
        %v594 = vadd.f32 %v587, %v592
        %v595 = vpack.c.bf16 %v565, %v565
        %v596 = vpack.c.bf16 %v594, %v594
        %v597 = vld [vmem:[#allocation13] sm:$0xf]
        %v598 = vld [vmem:[#allocation13 + $0x4] sm:$0xf]
        %v599 = vld [vmem:[#allocation13 + $0x8] sm:$0xf]
        %v600 = vld [vmem:[#allocation13 + $0xc] sm:$0xf]
        %v605 = vunpack.c.l.b16 %v597
        %v606 = vunpack.c.l.b16 %v598
        %v607 = vunpack.c.l.b16 %v599
        %v608 = vunpack.c.l.b16 %v600
        %v609 = vpack.c.b16 %v606, %v605
        %v610 = vpack.c.b16 %v608, %v607
        %v614 = vsel %vm537, %v595, 0
        %616 = vmatprep.subr.bf16.mxu0 0
        %617 = vmatpush1.bf16.msra.mxu0 0
        %618 = vmatprep.subr.bf16.mxu0 0
        %619 = vmatpush1.bf16.msra.mxu0 0
        %620 = vmatprep.subr.bf16.mxu0 0
        %621 = vmatpush1.bf16.msra.mxu0 0
        %622 = vmatprep.subr.bf16.mxu0 0
        %623 = vmatpush1.bf16.msra.mxu0 0
        %624 = vmatprep.subr.bf16.mxu0 0
        %625 = vmatpush1.bf16.msra.mxu0 0
        %626 = vmatprep.subr.bf16.mxu0 0
        %627 = vmatpush1.bf16.msra.mxu0 0
        %628 = vmatprep.subr.bf16.mxu0 0
        %629 = vmatpush1.bf16.msra.mxu0 %v610
        %630 = vmatprep.subr.bf16.mxu0 0
        %631 = vmatpush1.bf16.msra.mxu0 %v609
        %632 = vmatprep.subr.bf16.mxu0 0
        %633 = vmatpush2.bf16.msra.mxu0 0
        %634 = vmatprep.subr.bf16.mxu0 0
        %635 = vmatpush2.bf16.msra.mxu0 0
        %636 = vmatprep.subr.bf16.mxu0 0
        %637 = vmatpush2.bf16.msra.mxu0 0
        %638 = vmatprep.subr.bf16.mxu0 0
        %639 = vmatpush2.bf16.msra.mxu0 0
        %640 = vmatprep.subr.bf16.mxu0 0
        %641 = vmatpush2.bf16.msra.mxu0 0
        %642 = vmatprep.subr.bf16.mxu0 0
        %643 = vmatpush2.bf16.msra.mxu0 0
        %644 = vmatprep.subr.bf16.mxu0 0
        %645 = vmatpush2.bf16.msra.mxu0 0
        %646 = vmatprep.subr.bf16.mxu0 0
        %647 = vmatpush2.bf16.msra.mxu0 0
        %648 = vmatprep.mubr.bf16.mxu0 0
        %649 = vmatmul.mubr.bf16.gmra.mxu0 %v614
        %v650 = vpop.f32.mrf.mxu0
        %v651 = vadd.f32 0.0, %v650
        %v652 = vpop.f32.mrf.mxu0
        %v653 = vpop.f32.mrf.mxu0
        %v654 = vpop.f32.mrf.mxu0
        %655 = vdwg.mxu0
        %v656 = vld [vmem:[#allocation14] sm:$0xf]
        %v657 = vld [vmem:[#allocation14 + $0x4] sm:$0xf]
        %v658 = vld [vmem:[#allocation14 + $0x8] sm:$0xf]
        %v659 = vld [vmem:[#allocation14 + $0xc] sm:$0xf]
        %v664 = vunpack.c.l.b16 %v656
        %v665 = vunpack.c.l.b16 %v657
        %v666 = vunpack.c.l.b16 %v658
        %v667 = vunpack.c.l.b16 %v659
        %v668 = vpack.c.b16 %v665, %v664
        %v669 = vpack.c.b16 %v667, %v666
        %v673 = vsel %vm537, %v596, 0
        %675 = vmatprep.subr.bf16.mxu0 0
        %676 = vmatpush1.bf16.msra.mxu0 0
        %677 = vmatprep.subr.bf16.mxu0 0
        %678 = vmatpush1.bf16.msra.mxu0 0
        %679 = vmatprep.subr.bf16.mxu0 0
        %680 = vmatpush1.bf16.msra.mxu0 0
        %681 = vmatprep.subr.bf16.mxu0 0
        %682 = vmatpush1.bf16.msra.mxu0 0
        %683 = vmatprep.subr.bf16.mxu0 0
        %684 = vmatpush1.bf16.msra.mxu0 0
        %685 = vmatprep.subr.bf16.mxu0 0
        %686 = vmatpush1.bf16.msra.mxu0 0
        %687 = vmatprep.subr.bf16.mxu0 0
        %688 = vmatpush1.bf16.msra.mxu0 %v669
        %689 = vmatprep.subr.bf16.mxu0 0
        %690 = vmatpush1.bf16.msra.mxu0 %v668
        %691 = vmatprep.subr.bf16.mxu0 0
        %692 = vmatpush2.bf16.msra.mxu0 0
        %693 = vmatprep.subr.bf16.mxu0 0
        %694 = vmatpush2.bf16.msra.mxu0 0
        %695 = vmatprep.subr.bf16.mxu0 0
        %696 = vmatpush2.bf16.msra.mxu0 0
        %697 = vmatprep.subr.bf16.mxu0 0
        %698 = vmatpush2.bf16.msra.mxu0 0
        %699 = vmatprep.subr.bf16.mxu0 0
        %700 = vmatpush2.bf16.msra.mxu0 0
        %701 = vmatprep.subr.bf16.mxu0 0
        %702 = vmatpush2.bf16.msra.mxu0 0
        %703 = vmatprep.subr.bf16.mxu0 0
        %704 = vmatpush2.bf16.msra.mxu0 0
        %705 = vmatprep.subr.bf16.mxu0 0
        %706 = vmatpush2.bf16.msra.mxu0 0
        %707 = vmatprep.mubr.bf16.mxu0 0
        %708 = vmatmul.mubr.bf16.gmra.mxu0 %v673
        %v709 = vpop.f32.mrf.mxu0
        %v710 = vadd.f32 0.0, %v709
        %v711 = vpop.f32.mrf.mxu0
        %v712 = vpop.f32.mrf.mxu0
        %v713 = vpop.f32.mrf.mxu0
        %714 = vdwg.mxu0
        %v715 = vld [vmem:[#allocation16] sm:$0xf]
        %v716 = vld [vmem:[#allocation16 + $0x4] sm:$0xf]
        %v717 = vld [vmem:[#allocation16 + $0x8] sm:$0xf]
        %v718 = vld [vmem:[#allocation16 + $0xc] sm:$0xf]
        %v723 = vunpack.c.l.b16 %v715
        %v724 = vunpack.c.l.b16 %v716
        %v725 = vunpack.c.l.b16 %v717
        %v726 = vunpack.c.l.b16 %v718
        %v727 = vpack.c.b16 %v724, %v723
        %v728 = vpack.c.b16 %v726, %v725
        %731 = vmatprep.subr.bf16.mxu0 0
        %732 = vmatpush1.bf16.msra.mxu0 0
        %733 = vmatprep.subr.bf16.mxu0 0
        %734 = vmatpush1.bf16.msra.mxu0 0
        %735 = vmatprep.subr.bf16.mxu0 0
        %736 = vmatpush1.bf16.msra.mxu0 0
        %737 = vmatprep.subr.bf16.mxu0 0
        %738 = vmatpush1.bf16.msra.mxu0 0
        %739 = vmatprep.subr.bf16.mxu0 0
        %740 = vmatpush1.bf16.msra.mxu0 0
        %741 = vmatprep.subr.bf16.mxu0 0
        %742 = vmatpush1.bf16.msra.mxu0 0
        %743 = vmatprep.subr.bf16.mxu0 0
        %744 = vmatpush1.bf16.msra.mxu0 %v728
        %745 = vmatprep.subr.bf16.mxu0 0
        %746 = vmatpush1.bf16.msra.mxu0 %v727
        %747 = vmatprep.subr.bf16.mxu0 0
        %748 = vmatpush2.bf16.msra.mxu0 0
        %749 = vmatprep.subr.bf16.mxu0 0
        %750 = vmatpush2.bf16.msra.mxu0 0
        %751 = vmatprep.subr.bf16.mxu0 0
        %752 = vmatpush2.bf16.msra.mxu0 0
        %753 = vmatprep.subr.bf16.mxu0 0
        %754 = vmatpush2.bf16.msra.mxu0 0
        %755 = vmatprep.subr.bf16.mxu0 0
        %756 = vmatpush2.bf16.msra.mxu0 0
        %757 = vmatprep.subr.bf16.mxu0 0
        %758 = vmatpush2.bf16.msra.mxu0 0
        %759 = vmatprep.subr.bf16.mxu0 0
        %760 = vmatpush2.bf16.msra.mxu0 0
        %761 = vmatprep.subr.bf16.mxu0 0
        %762 = vmatpush2.bf16.msra.mxu0 0
        %763 = vmatprep.mubr.bf16.mxu0 0
        %764 = vmatmul.mubr.bf16.gmra.mxu0 %v673
        %v765 = vpop.f32.mrf.mxu0
        %v766 = vadd.f32 0.0, %v765
        %v767 = vpop.f32.mrf.mxu0
        %v768 = vpop.f32.mrf.mxu0
        %v769 = vpop.f32.mrf.mxu0
        %770 = vdwg.mxu0
        %v771 = vpack.c.bf16 %v651, %v651
        %v772 = vpack.c.bf16 %v710, %v710
        %v773 = vpack.c.bf16 %v766, %v766
        %vm774 = vcmask 130048
        %v776 = vsel %vm774, %v771, 0
        %v779 = vsel %vm774, %v772, 0
        %781 = vmatprep.subr.bf16.mxu0 0
        %782 = vmatpush1.bf16.xpose.msra.mxu0 0
        %783 = vmatprep.subr.bf16.mxu0 0
        %784 = vmatpush1.bf16.xpose.msra.mxu0 0
        %785 = vmatprep.subr.bf16.mxu0 0
        %786 = vmatpush1.bf16.xpose.msra.mxu0 0
        %787 = vmatprep.subr.bf16.mxu0 0
        %788 = vmatpush1.bf16.xpose.msra.mxu0 0
        %789 = vmatprep.subr.bf16.mxu0 0
        %790 = vmatpush1.bf16.xpose.msra.mxu0 0
        %791 = vmatprep.subr.bf16.mxu0 0
        %792 = vmatpush1.bf16.xpose.msra.mxu0 0
        %793 = vmatprep.subr.bf16.mxu0 0
        %794 = vmatpush1.bf16.xpose.msra.mxu0 0
        %795 = vmatprep.subr.bf16.mxu0 0
        %796 = vmatpush1.bf16.xpose.msra.mxu0 %v779
        %797 = vmatprep.subr.bf16.mxu0 0
        %798 = vmatpush2.bf16.xpose.msra.mxu0 0
        %799 = vmatprep.subr.bf16.mxu0 0
        %800 = vmatpush2.bf16.xpose.msra.mxu0 0
        %801 = vmatprep.subr.bf16.mxu0 0
        %802 = vmatpush2.bf16.xpose.msra.mxu0 0
        %803 = vmatprep.subr.bf16.mxu0 0
        %804 = vmatpush2.bf16.xpose.msra.mxu0 0
        %805 = vmatprep.subr.bf16.mxu0 0
        %806 = vmatpush2.bf16.xpose.msra.mxu0 0
        %807 = vmatprep.subr.bf16.mxu0 0
        %808 = vmatpush2.bf16.xpose.msra.mxu0 0
        %809 = vmatprep.subr.bf16.mxu0 0
        %810 = vmatpush2.bf16.xpose.msra.mxu0 0
        %811 = vmatprep.subr.bf16.mxu0 0
        %812 = vmatpush2.bf16.xpose.msra.mxu0 0
        %813 = vmatprep.mubr.bf16.mxu0 0
        %814 = vmatmul.mubr.bf16.gmra.mxu0 %v776
        %v815 = vpop.f32.mrf.mxu0
        %v816 = vadd.f32 0.0, %v815
        %v817 = vpop.f32.mrf.mxu0
        %v818 = vpop.f32.mrf.mxu0
        %v819 = vpop.f32.mrf.mxu0
        %820 = vdwg.mxu0
        %vm821 = vcmask 64512
        %v822 = vsel %vm821, %v816, -inf
        %823 = vmax.xlane.f32.xlu0 %v822
        %v824 = vpop.xlane.xlu0 %823
        %v825 = vsub.f32 %v816, %v824
        %v826 = vmul.f32 %v825, 1.442695
        %v827 = vpow.pop %v826
        %v828 = vsel %vm821, %v827, 0.0
        %829 = vadd.xlane.f32.xlu0 %v828
        %v830 = vpop.xlane.xlu0 %829
        %v831 = vrcp.pop %v830
        %v832 = vmul.f32 %v827, %v831
        %v833 = vpack.c.bf16 %v832, %v832
        %v835 = vsel %vm821, %v833, 0
        %vm837 = vcmask 1043456
        %v839 = vsel %vm837, %v773, 0
        %841 = vmatprep.subr.bf16.mxu0 0
        %842 = vmatpush1.bf16.msra.mxu0 0
        %843 = vmatprep.subr.bf16.mxu0 0
        %844 = vmatpush1.bf16.msra.mxu0 0
        %845 = vmatprep.subr.bf16.mxu0 0
        %846 = vmatpush1.bf16.msra.mxu0 0
        %847 = vmatprep.subr.bf16.mxu0 0
        %848 = vmatpush1.bf16.msra.mxu0 0
        %849 = vmatprep.subr.bf16.mxu0 0
        %850 = vmatpush1.bf16.msra.mxu0 0
        %851 = vmatprep.subr.bf16.mxu0 0
        %852 = vmatpush1.bf16.msra.mxu0 0
        %853 = vmatprep.subr.bf16.mxu0 0
        %854 = vmatpush1.bf16.msra.mxu0 0
        %855 = vmatprep.subr.bf16.mxu0 0
        %856 = vmatpush1.bf16.msra.mxu0 %v839
        %857 = vmatprep.subr.bf16.mxu0 0
        %858 = vmatpush2.bf16.msra.mxu0 0
        %859 = vmatprep.subr.bf16.mxu0 0
        %860 = vmatpush2.bf16.msra.mxu0 0
        %861 = vmatprep.subr.bf16.mxu0 0
        %862 = vmatpush2.bf16.msra.mxu0 0
        %863 = vmatprep.subr.bf16.mxu0 0
        %864 = vmatpush2.bf16.msra.mxu0 0
        %865 = vmatprep.subr.bf16.mxu0 0
        %866 = vmatpush2.bf16.msra.mxu0 0
        %867 = vmatprep.subr.bf16.mxu0 0
        %868 = vmatpush2.bf16.msra.mxu0 0
        %869 = vmatprep.subr.bf16.mxu0 0
        %870 = vmatpush2.bf16.msra.mxu0 0
        %871 = vmatprep.subr.bf16.mxu0 0
        %872 = vmatpush2.bf16.msra.mxu0 0
        %873 = vmatprep.mubr.bf16.mxu0 0
        %874 = vmatmul.mubr.bf16.gmra.mxu0 %v835
        %v875 = vpop.f32.mrf.mxu0
        %v876 = vadd.f32 0.0, %v875
        %v877 = vpop.f32.mrf.mxu0
        %v878 = vpop.f32.mrf.mxu0
        %v879 = vpop.f32.mrf.mxu0
        %880 = vdwg.mxu0
        %v881 = vpack.c.bf16 %v876, %v876
        %v882 = vld [vmem:[%s9] sm:$0xf]
        %v883 = vld [vmem:[%s9 + $0x4] sm:$0xf]
        %885 = vrot.lane.b32.xlu0 %v771, 112
        %v886 = vpop.permute.xlu0 %885
        %888 = vrot.lane.b32.xlu0 %v772, 112
        %v889 = vpop.permute.xlu0 %888
        %v891 = vsel %vm774, %v886, 0
        %v894 = vsel %vm774, %v889, 0
        %896 = vmatprep.subr.bf16.mxu0 0
        %897 = vmatpush1.bf16.xpose.msra.mxu0 0
        %898 = vmatprep.subr.bf16.mxu0 0
        %899 = vmatpush1.bf16.xpose.msra.mxu0 0
        %900 = vmatprep.subr.bf16.mxu0 0
        %901 = vmatpush1.bf16.xpose.msra.mxu0 0
        %902 = vmatprep.subr.bf16.mxu0 0
        %903 = vmatpush1.bf16.xpose.msra.mxu0 0
        %904 = vmatprep.subr.bf16.mxu0 0
        %905 = vmatpush1.bf16.xpose.msra.mxu0 0
        %906 = vmatprep.subr.bf16.mxu0 0
        %907 = vmatpush1.bf16.xpose.msra.mxu0 0
        %908 = vmatprep.subr.bf16.mxu0 0
        %909 = vmatpush1.bf16.xpose.msra.mxu0 0
        %910 = vmatprep.subr.bf16.mxu0 0
        %911 = vmatpush1.bf16.xpose.msra.mxu0 %v894
        %912 = vmatprep.subr.bf16.mxu0 0
        %913 = vmatpush2.bf16.xpose.msra.mxu0 0
        %914 = vmatprep.subr.bf16.mxu0 0
        %915 = vmatpush2.bf16.xpose.msra.mxu0 0
        %916 = vmatprep.subr.bf16.mxu0 0
        %917 = vmatpush2.bf16.xpose.msra.mxu0 0
        %918 = vmatprep.subr.bf16.mxu0 0
        %919 = vmatpush2.bf16.xpose.msra.mxu0 0
        %920 = vmatprep.subr.bf16.mxu0 0
        %921 = vmatpush2.bf16.xpose.msra.mxu0 0
        %922 = vmatprep.subr.bf16.mxu0 0
        %923 = vmatpush2.bf16.xpose.msra.mxu0 0
        %924 = vmatprep.subr.bf16.mxu0 0
        %925 = vmatpush2.bf16.xpose.msra.mxu0 0
        %926 = vmatprep.subr.bf16.mxu0 0
        %927 = vmatpush2.bf16.xpose.msra.mxu0 0
        %928 = vmatprep.mubr.bf16.mxu0 0
        %929 = vmatmul.mubr.bf16.gmra.mxu0 %v891
        %v930 = vpop.f32.mrf.mxu0
        %v931 = vadd.f32 0.0, %v930
        %v932 = vpop.f32.mrf.mxu0
        %v933 = vpop.f32.mrf.mxu0
        %v934 = vpop.f32.mrf.mxu0
        %935 = vdwg.mxu0
        %v936 = vsel %vm821, %v931, -inf
        %937 = vmax.xlane.f32.xlu0 %v936
        %v938 = vpop.xlane.xlu0 %937
        %v939 = vsub.f32 %v931, %v938
        %v940 = vmul.f32 %v939, 1.442695
        %v941 = vpow.pop %v940
        %v942 = vsel %vm821, %v941, 0.0
        %943 = vadd.xlane.f32.xlu0 %v942
        %v944 = vpop.xlane.xlu0 %943
        %v945 = vrcp.pop %v944
        %v946 = vmul.f32 %v941, %v945
        %v947 = vpack.c.bf16 %v946, %v946
        %949 = vrot.lane.b32.xlu0 %v773, 112
        %v950 = vpop.permute.xlu0 %949
        %v952 = vsel %vm821, %v947, 0
        %v955 = vsel %vm837, %v950, 0
        %957 = vmatprep.subr.bf16.mxu0 0
        %958 = vmatpush1.bf16.msra.mxu0 0
        %959 = vmatprep.subr.bf16.mxu0 0
        %960 = vmatpush1.bf16.msra.mxu0 0
        %961 = vmatprep.subr.bf16.mxu0 0
        %962 = vmatpush1.bf16.msra.mxu0 0
        %963 = vmatprep.subr.bf16.mxu0 0
        %964 = vmatpush1.bf16.msra.mxu0 0
        %965 = vmatprep.subr.bf16.mxu0 0
        %966 = vmatpush1.bf16.msra.mxu0 0
        %967 = vmatprep.subr.bf16.mxu0 0
        %968 = vmatpush1.bf16.msra.mxu0 0
        %969 = vmatprep.subr.bf16.mxu0 0
        %970 = vmatpush1.bf16.msra.mxu0 0
        %971 = vmatprep.subr.bf16.mxu0 0
        %972 = vmatpush1.bf16.msra.mxu0 %v955
        %973 = vmatprep.subr.bf16.mxu0 0
        %974 = vmatpush2.bf16.msra.mxu0 0
        %975 = vmatprep.subr.bf16.mxu0 0
        %976 = vmatpush2.bf16.msra.mxu0 0
        %977 = vmatprep.subr.bf16.mxu0 0
        %978 = vmatpush2.bf16.msra.mxu0 0
        %979 = vmatprep.subr.bf16.mxu0 0
        %980 = vmatpush2.bf16.msra.mxu0 0
        %981 = vmatprep.subr.bf16.mxu0 0
        %982 = vmatpush2.bf16.msra.mxu0 0
        %983 = vmatprep.subr.bf16.mxu0 0
        %984 = vmatpush2.bf16.msra.mxu0 0
        %985 = vmatprep.subr.bf16.mxu0 0
        %986 = vmatpush2.bf16.msra.mxu0 0
        %987 = vmatprep.subr.bf16.mxu0 0
        %988 = vmatpush2.bf16.msra.mxu0 0
        %989 = vmatprep.mubr.bf16.mxu0 0
        %990 = vmatmul.mubr.bf16.gmra.mxu0 %v952
        %v991 = vpop.f32.mrf.mxu0
        %v992 = vadd.f32 0.0, %v991
        %v993 = vpop.f32.mrf.mxu0
        %v994 = vpop.f32.mrf.mxu0
        %v995 = vpop.f32.mrf.mxu0
        %996 = vdwg.mxu0
        %v997 = vpack.c.bf16 %v992, %v992
        %v998 = vld [vmem:[%s9 + $0x8] sm:$0xf]
        %v999 = vld [vmem:[%s9 + $0xc] sm:$0xf]
        %v1002 = vunpack.c.l.b16 %v998
        %v1003 = vunpack.c.l.b16 %v999
        %v1004 = vpack.c.b16 %v1003, %v1002
        %v1007 = vsel %vm774, %v997, 0
        %1009 = vmatprep.subr.bf16.mxu0 0
        %1010 = vmatpush1.bf16.msra.mxu0 0
        %1011 = vmatprep.subr.bf16.mxu0 0
        %1012 = vmatpush1.bf16.msra.mxu0 0
        %1013 = vmatprep.subr.bf16.mxu0 0
        %1014 = vmatpush1.bf16.msra.mxu0 0
        %1015 = vmatprep.subr.bf16.mxu0 0
        %1016 = vmatpush1.bf16.msra.mxu0 0
        %1017 = vmatprep.subr.bf16.mxu0 0
        %1018 = vmatpush1.bf16.msra.mxu0 0
        %1019 = vmatprep.subr.bf16.mxu0 0
        %1020 = vmatpush1.bf16.msra.mxu0 0
        %1021 = vmatprep.subr.bf16.mxu0 0
        %1022 = vmatpush1.bf16.msra.mxu0 0
        %1023 = vmatprep.subr.bf16.mxu0 0
        %1024 = vmatpush1.bf16.msra.mxu0 %v1004
        %1025 = vmatprep.subr.bf16.mxu0 0
        %1026 = vmatpush2.bf16.msra.mxu0 0
        %1027 = vmatprep.subr.bf16.mxu0 0
        %1028 = vmatpush2.bf16.msra.mxu0 0
        %1029 = vmatprep.subr.bf16.mxu0 0
        %1030 = vmatpush2.bf16.msra.mxu0 0
        %1031 = vmatprep.subr.bf16.mxu0 0
        %1032 = vmatpush2.bf16.msra.mxu0 0
        %1033 = vmatprep.subr.bf16.mxu0 0
        %1034 = vmatpush2.bf16.msra.mxu0 0
        %1035 = vmatprep.subr.bf16.mxu0 0
        %1036 = vmatpush2.bf16.msra.mxu0 0
        %1037 = vmatprep.subr.bf16.mxu0 0
        %1038 = vmatpush2.bf16.msra.mxu0 0
        %1039 = vmatprep.subr.bf16.mxu0 0
        %1040 = vmatpush2.bf16.msra.mxu0 0
        %1041 = vmatprep.mubr.bf16.mxu0 0
        %1042 = vmatmul.mubr.bf16.gmra.mxu0 %v1007
        %v1043 = vpop.f32.mrf.mxu0
        %v1044 = vadd.f32 0.0, %v1043
        %v1045 = vpop.f32.mrf.mxu0
        %v1046 = vpop.f32.mrf.mxu0
        %v1047 = vpop.f32.mrf.mxu0
        %1048 = vdwg.mxu0
        %v1051 = vunpack.c.l.b16 %v882
        %v1052 = vunpack.c.l.b16 %v883
        %v1053 = vpack.c.b16 %v1052, %v1051
        %v1056 = vsel %vm774, %v881, 0
        %1058 = vmatprep.subr.bf16.mxu0 0
        %1059 = vmatpush1.bf16.msra.mxu0 0
        %1060 = vmatprep.subr.bf16.mxu0 0
        %1061 = vmatpush1.bf16.msra.mxu0 0
        %1062 = vmatprep.subr.bf16.mxu0 0
        %1063 = vmatpush1.bf16.msra.mxu0 0
        %1064 = vmatprep.subr.bf16.mxu0 0
        %1065 = vmatpush1.bf16.msra.mxu0 0
        %1066 = vmatprep.subr.bf16.mxu0 0
        %1067 = vmatpush1.bf16.msra.mxu0 0
        %1068 = vmatprep.subr.bf16.mxu0 0
        %1069 = vmatpush1.bf16.msra.mxu0 0
        %1070 = vmatprep.subr.bf16.mxu0 0
        %1071 = vmatpush1.bf16.msra.mxu0 0
        %1072 = vmatprep.subr.bf16.mxu0 0
        %1073 = vmatpush1.bf16.msra.mxu0 %v1053
        %1074 = vmatprep.subr.bf16.mxu0 0
        %1075 = vmatpush2.bf16.msra.mxu0 0
        %1076 = vmatprep.subr.bf16.mxu0 0
        %1077 = vmatpush2.bf16.msra.mxu0 0
        %1078 = vmatprep.subr.bf16.mxu0 0
        %1079 = vmatpush2.bf16.msra.mxu0 0
        %1080 = vmatprep.subr.bf16.mxu0 0
        %1081 = vmatpush2.bf16.msra.mxu0 0
        %1082 = vmatprep.subr.bf16.mxu0 0
        %1083 = vmatpush2.bf16.msra.mxu0 0
        %1084 = vmatprep.subr.bf16.mxu0 0
        %1085 = vmatpush2.bf16.msra.mxu0 0
        %1086 = vmatprep.subr.bf16.mxu0 0
        %1087 = vmatpush2.bf16.msra.mxu0 0
        %1088 = vmatprep.subr.bf16.mxu0 0
        %1089 = vmatpush2.bf16.msra.mxu0 0
        %1090 = vmatprep.mubr.bf16.mxu0 0
        %1091 = vmatmul.mubr.bf16.gmra.mxu0 %v1056
        %v1092 = vpop.f32.mrf.mxu0
        %v1093 = vadd.f32 %v1044, %v1092
        %v1094 = vpop.f32.mrf.mxu0
        %v1095 = vpop.f32.mrf.mxu0
        %v1096 = vpop.f32.mrf.mxu0
        %1097 = vdwg.mxu0
        %v1098 = vld [vmem:[%s10] sm:$0x1]
        %v1100 = vlaneseq
        %v1101 = vshrl.u32 %v1100, 7
        %v1102 = vsub.s32 0, %v1101
        %v1103 = vrot.slane %v1098, %v1102
        %v1105 = vadd.f32 %v1093, %v1103
        %1106 = vst.msk [vmem:[%s531] sm:$0xff] %vm537, %v1105
        %s1107 = sand.u32 %s283, 1
        %s1108 = scalar_lea.sflag [#allocation4], %s1107
        %s1109 = sand.u32 %s283, 1
        %s1110 = smul.addr %s1109, 8
        %s1111 = scalar_lea.vmem [#allocation17], %s1110
        // Predicated region
        $region101: #{tpu_custom_call.1} parent=63 // pred_check
          %p1112 = pneg %p293
        $region102: #{tpu_custom_call.1} parent=63 // pred_check_branch
          %1114 = sbr.rel (%p1112) target = $region104
        $region103: #{tpu_custom_call.1} parent=63 // pred_region
          %s1116 = ssub.s32 128, 128
          %1117 = vsyncadd %s1108, %s1116
          %s1118 = smul.addr %s34, 128
          %s1119 = scalar_lea.hbm %s11, %s1118
          %s1121 = sshll.u32 %s1111, 4
          %s1122 = int_to_ptr.vmem [resolvable:$true] %s1121
          %1124 = dma.vmem_to_hbm [thread:$0]  %s1122, 128, %s1119, %s1108
        $region104: #{tpu_custom_call.1} parent=63 // pred_fallthru
          _
      $region64: #{tpu_custom_call.1} parent=5 // pred_fallthru
        _
      %p1125 = scmp.le.s32.totalorder 2, %s29
      // Predicated region
      $region105: #{tpu_custom_call.1} parent=5 // pred_check
        %p1126 = pneg %p1125
      $region106: #{tpu_custom_call.1} parent=5 // pred_check_branch
        %1128 = sbr.rel (%p1126) target = $region108
      $region107: #{tpu_custom_call.1} parent=5 // pred_region
        %s1129 = ssub.s32 %s29, 2
        // Predicated region
        $region109: #{tpu_custom_call.1} parent=107 // pred_check
          %p1130 = pneg %p299
        $region110: #{tpu_custom_call.1} parent=107 // pred_check_branch
          %1132 = sbr.rel (%p1130) target = $region112
        $region111: #{tpu_custom_call.1} parent=107 // pred_region
          %s1133 = sand.u32 %s284, 1
          %s1134 = scalar_lea.sflag [#allocation4], %s1133
          %s1135 = sand.u32 %s284, 1
          %s1136 = smul.addr %s1135, 8
          %s1137 = scalar_lea.vmem [#allocation17], %s1136
          %1138 = dma.done %s1134, 128
        $region112: #{tpu_custom_call.1} parent=107 // pred_fallthru
          _
      $region108: #{tpu_custom_call.1} parent=5 // pred_fallthru
        _
    $region6: #{tpu_custom_call.1} parent=1 // loop_footer
      %s33 = sadd.s32 1, %s29
    $region7: #{tpu_custom_call.1} parent=1 // loop_footer_branch
      %28 = sbr.rel target = $region3
    $region8: #{tpu_custom_call.1} parent=1 // loop_exit
      _
    %1139 = vsyncpa [#allocation3], 1
    %s1140 = scalar_lea.sflag [#allocation3], 1
    %1141 = vsyncpa %s1140, 1
    %1142 = vsyncpa [#allocation6], 1
    %s1143 = scalar_lea.sflag [#allocation6], 1
    %1144 = vsyncpa %s1143, 1
    %1145 = vsyncpa [#allocation9], 1
    %1146 = vsyncpa [#allocation12], 1
    %1147 = vsyncpa [#allocation15], 1
    %1148 = vsyncpa [#allocation4], 1
    %s1149 = scalar_lea.sflag [#allocation4], 1
    %1150 = vsyncpa %s1149, 1

</llo_original>
